<compile_context>
chip_gen: v5e
topology: v5e:2x2
jax: 0.10.0
libtpu: 0.0.40
codegen_flags: <defaults>
</compile_context>

<pallas_src>
import jax
import jax.numpy as jnp
from jax.experimental import pallas as pl
from jax.experimental.pallas import tpu as pltpu

LANE = 128
SUBLANE = 8

HIDDEN = 100       # logical hidden width
BOTTLENECK = 50    # logical bottleneck width


def _round_up(x, m):
    return (x + m - 1) // m * m


def _pad2(a, rows, cols):
    r, c = a.shape
    return jnp.pad(a, ((0, rows - r), (0, cols - c)))


# --------------------------------------------------------------------------
# Kernel
# --------------------------------------------------------------------------
def autoencoder_kernel(x_ref,
                       w1_ref, b1_ref,
                       w2_ref, b2_ref,
                       w3_ref, b3_ref,
                       w4_ref, b4_ref,
                       enc_ref, dec_ref):
    x = x_ref[...]                                   # (tb, d_in_p) bf16

    # encoder: Linear -> ReLU -> Linear   (f32 accumulate, bf16 operands)
    h1 = jnp.dot(x, w1_ref[...], preferred_element_type=jnp.float32) + b1_ref[...]
    h1 = jnp.maximum(h1, 0.0).astype(w2_ref.dtype)
    enc = jnp.dot(h1, w2_ref[...], preferred_element_type=jnp.float32) + b2_ref[...]

    # decoder: Linear -> Dropout (eval mode: identity) -> ReLU -> Linear
    # TODO(synk): training-mode stochastic dropout (pltpu.prng_seed +
    # pltpu.prng_random_bits with a per-grid-step seed offset) not emitted.
    h2 = jnp.dot(enc.astype(w3_ref.dtype), w3_ref[...],
                 preferred_element_type=jnp.float32) + b3_ref[...]
    h2 = jnp.maximum(h2, 0.0).astype(w4_ref.dtype)
    dec = jnp.dot(h2, w4_ref[...], preferred_element_type=jnp.float32) + b4_ref[...]

    enc_ref[...] = enc.astype(enc_ref.dtype)
    dec_ref[...] = dec.astype(dec_ref.dtype)


# --------------------------------------------------------------------------
# Parameter preparation: pad to lane-dense 128 multiples + cast, ONCE.
# Zero-padded rows/cols contribute exactly zero through Linear/ReLU, so the
# logical slice of the result is exact.
# --------------------------------------------------------------------------
def prepare_params(params, *, weight_dtype=jnp.bfloat16):
    init_dim = params["w1"].shape[0]
    d_in_p = _round_up(init_dim, LANE)      # e.g. 32  -> 128
    h_p = _round_up(HIDDEN, LANE)           # 100 -> 128
    bot_p = _round_up(BOTTLENECK, LANE)     # 50  -> 128
    return {
        "w1": _pad2(params["w1"], d_in_p, h_p).astype(weight_dtype),
        "b1": _pad2(params["b1"], 1, h_p).astype(jnp.float32),
        "w2": _pad2(params["w2"], h_p, bot_p).astype(weight_dtype),
        "b2": _pad2(params["b2"], 1, bot_p).astype(jnp.float32),
        "w3": _pad2(params["w3"], bot_p, h_p).astype(weight_dtype),
        "b3": _pad2(params["b3"], 1, h_p).astype(jnp.float32),
        "w4": _pad2(params["w4"], h_p, d_in_p).astype(weight_dtype),
        "b4": _pad2(params["b4"], 1, d_in_p).astype(jnp.float32),
    }


# --------------------------------------------------------------------------
# Forward wrapper
# --------------------------------------------------------------------------
def autoencoder_forward(x, pp, *, max_batch_tile=4096,
                        single_buffer_weights=True,
                        out_dtype=jnp.float32):
    """x: (B, init_dim) f32.  pp: output of prepare_params.

    Returns (enc (B, 50), dec (B, init_dim)) — PyTorch forward in eval mode.
    """
    B, init_dim = x.shape
    d_in_p, h_p = pp["w1"].shape
    bot_p = pp["w2"].shape[1]
    assert init_dim <= d_in_p
    stream_dtype = pp["w1"].dtype

    # ---- per-generation VMEM budget ----
    try:
        vmem_cap = int(pltpu.get_tpu_info().vmem_capacity_bytes)
    except Exception:
        vmem_cap = 64 << 20                 # conservative (v7x physical)
    budget = min(vmem_cap // 2, 48 << 20)   # ~32 MiB v7x, 48 MiB v5e/v6e

    wbytes = sum(int(a.size) * a.dtype.itemsize for a in pp.values())
    weight_resident = wbytes if single_buffer_weights else 2 * wbytes

    sdt = jnp.dtype(stream_dtype).itemsize
    odt = jnp.dtype(out_dtype).itemsize
    per_row_io = sdt * d_in_p + odt * (bot_p + d_in_p)     # x in, enc/dec out
    per_row_live = 16 * h_p + 8 * bot_p                    # intermediates (conservative)
    headroom = 2 << 20

    avail = max(budget - weight_resident - headroom, 1 << 20)
    tb_vmem = max((avail // (2 * per_row_io + per_row_live))
                  // SUBLANE * SUBLANE, SUBLANE)

    # ---- batch tiling: big tiles, but >= 2 grid steps when B allows (v7x) ----
    two_step_cap = max(_round_up(pl.cdiv(B, 2), SUBLANE), SUBLANE)
    tb = min(_round_up(max_batch_tile, SUBLANE), tb_vmem,
             two_step_cap, _round_up(B, SUBLANE))
    b_pad = _round_up(B, tb)
    nb = b_pad // tb

    x_p = jnp.pad(x, ((0, b_pad - B), (0, d_in_p - init_dim))).astype(stream_dtype)

    # ---- VMEM limit & cost hint ----
    need = weight_resident + (2 * per_row_io + per_row_live) * tb + headroom
    vmem_limit = int(min(max(need, 8 << 20), max(budget, need)))

    flops = 2 * b_pad * (d_in_p * h_p + h_p * bot_p + bot_p * h_p + h_p * d_in_p)
    bytes_accessed = b_pad * per_row_io + wbytes
    cost = pl.CostEstimate(flops=flops, transcendentals=0,
                           bytes_accessed=bytes_accessed)

    # Streamed (batch-tiled) arrays.
    x_spec = pl.BlockSpec((tb, d_in_p), lambda i: (i, 0))
    enc_spec = pl.BlockSpec((tb, bot_p), lambda i: (i, 0))
    dec_spec = pl.BlockSpec((tb, d_in_p), lambda i: (i, 0))

    # VMEM-resident weights/biases: whole-array block, constant index map.
    # Single-buffered when supported — their block index never changes.
    def _resident(arr):
        kwargs = {}
        if single_buffer_weights:
            kwargs["pipeline_mode"] = pl.Buffered(1)
        return pl.BlockSpec(arr.shape, lambda i: (0, 0), **kwargs)

    grid_spec = pltpu.PrefetchScalarGridSpec(
        num_scalar_prefetch=0,
        grid=(nb,),
        in_specs=[
            x_spec,
            _resident(pp["w1"]), _resident(pp["b1"]),
            _resident(pp["w2"]), _resident(pp["b2"]),
            _resident(pp["w3"]), _resident(pp["b3"]),
            _resident(pp["w4"]), _resident(pp["b4"]),
        ],
        out_specs=(enc_spec, dec_spec),
    )

    enc_p, dec_p = pl.pallas_call(
        autoencoder_kernel,
        out_shape=(jax.ShapeDtypeStruct((b_pad, bot_p), out_dtype),
                   jax.ShapeDtypeStruct((b_pad, d_in_p), out_dtype)),
        grid_spec=grid_spec,
        compiler_params=pltpu.CompilerParams(
            dimension_semantics=("parallel",),
            vmem_limit_bytes=vmem_limit),
        cost_estimate=cost,
    )(x_p, pp["w1"], pp["b1"], pp["w2"], pp["b2"],
      pp["w3"], pp["b3"], pp["w4"], pp["b4"])

    # Strip batch + feature padding.
    return enc_p[:B, :BOTTLENECK], dec_p[:B, :init_dim]


# --------------------------------------------------------------------------
# Reference / init helpers
# --------------------------------------------------------------------------
def init_params(key, init_dim):
    """Deterministic synthetic init (PyTorch-like uniform fan-in scaling)."""
    dims = [(init_dim, HIDDEN), (HIDDEN, BOTTLENECK),
            (BOTTLENECK, HIDDEN), (HIDDEN, init_dim)]
    params = {}
    keys = jax.random.split(key, 2 * len(dims))
    for i, (din, dout) in enumerate(dims):
        bound = 1.0 / jnp.sqrt(din)
        params[f"w{i+1}"] = jax.random.uniform(
            keys[2 * i], (din, dout), jnp.float32, -bound, bound)
        params[f"b{i+1}"] = jax.random.uniform(
            keys[2 * i + 1], (1, dout), jnp.float32, -bound, bound)
    return params


def reference_forward(x, params, *, cast_dtype=None):
    """Pure-JAX reference.  cast_dtype mirrors the kernel's bf16 operand casts."""
    def prep(a):
        return a.astype(cast_dtype) if cast_dtype is not None else a
    h1 = jnp.maximum(jnp.dot(prep(x), prep(params["w1"]),
                             preferred_element_type=jnp.float32) + params["b1"], 0.0)
    enc = jnp.dot(prep(h1), prep(params["w2"]),
                  preferred_element_type=jnp.float32) + params["b2"]
    h2 = jnp.maximum(jnp.dot(prep(enc), prep(params["w3"]),
                             preferred_element_type=jnp.float32) + params["b3"], 0.0)
    dec = jnp.dot(prep(h2), prep(params["w4"]),
                  preferred_element_type=jnp.float32) + params["b4"]
    return enc, dec


if __name__ == "__main__":
    key = jax.random.PRNGKey(0)
    k_x, k_p = jax.random.split(key)

    B, INIT_DIM = 16, 32
    x = jax.random.normal(k_x, (B, INIT_DIM), jnp.float32)
    params = init_params(k_p, INIT_DIM)
    prepared = prepare_params(params)           # pad + bf16-cast ONCE

    def run(single_buffer_weights):
        fwd = jax.jit(autoencoder_forward,
                      static_argnames=("single_buffer_weights",))
        out = fwd(x, prepared, single_buffer_weights=single_buffer_weights)
        return jax.block_until_ready(out)

    try:
        enc, dec = run(True)
    except Exception:
        # Fallback if this JAX build rejects pl.Buffered(1) single buffering.
        enc, dec = run(False)

    enc_ref, dec_ref = reference_forward(x, params, cast_dtype=jnp.bfloat16)
    assert enc.shape == (B, BOTTLENECK) and dec.shape == (B, INIT_DIM)
    assert jnp.allclose(enc, enc_ref, atol=2e-3, rtol=2e-3)
    assert jnp.allclose(dec, dec_ref, atol=2e-3, rtol=2e-3)

    print("KERNEL_OK")
</pallas_src>

<mosaic_0001>
module attributes {stable_mosaic.version = 11 : i64} {
  func.func @autoencoder_kernel(%arg0: i32, %arg1: memref<8x128xbf16, #tpu.memory_space<vmem>>, %arg2: memref<128x128xbf16, #tpu.memory_space<vmem>>, %arg3: memref<1x128xf32, #tpu.memory_space<vmem>>, %arg4: memref<128x128xbf16, #tpu.memory_space<vmem>>, %arg5: memref<1x128xf32, #tpu.memory_space<vmem>>, %arg6: memref<128x128xbf16, #tpu.memory_space<vmem>>, %arg7: memref<1x128xf32, #tpu.memory_space<vmem>>, %arg8: memref<128x128xbf16, #tpu.memory_space<vmem>>, %arg9: memref<1x128xf32, #tpu.memory_space<vmem>>, %arg10: memref<8x128xf32, #tpu.memory_space<vmem>>, %arg11: memref<8x128xf32, #tpu.memory_space<vmem>>) attributes {dimension_semantics = [#tpu.dimension_semantics<parallel>], iteration_bounds = array<i64: 2>, scalar_prefetch = 0 : i64, scratch_operands = 0 : i64, tpu.core_type = #tpu.core_type<tc>, window_params = [{transform_indices = @transform_0, window_bounds = array<i64: 8, 128>}, {pipeline_mode = #tpu.pipeline_mode<synchronous>, transform_indices = @transform_1, window_bounds = array<i64: 128, 128>}, {pipeline_mode = #tpu.pipeline_mode<synchronous>, transform_indices = @transform_2, window_bounds = array<i64: 1, 128>}, {pipeline_mode = #tpu.pipeline_mode<synchronous>, transform_indices = @transform_3, window_bounds = array<i64: 128, 128>}, {pipeline_mode = #tpu.pipeline_mode<synchronous>, transform_indices = @transform_4, window_bounds = array<i64: 1, 128>}, {pipeline_mode = #tpu.pipeline_mode<synchronous>, transform_indices = @transform_5, window_bounds = array<i64: 128, 128>}, {pipeline_mode = #tpu.pipeline_mode<synchronous>, transform_indices = @transform_6, window_bounds = array<i64: 1, 128>}, {pipeline_mode = #tpu.pipeline_mode<synchronous>, transform_indices = @transform_7, window_bounds = array<i64: 128, 128>}, {pipeline_mode = #tpu.pipeline_mode<synchronous>, transform_indices = @transform_8, window_bounds = array<i64: 1, 128>}, {transform_indices = @transform_9, window_bounds = array<i64: 8, 128>}, {transform_indices = @transform_10, window_bounds = array<i64: 8, 128>}]} {
    %c0 = arith.constant 0 : index
    %c0_0 = arith.constant 0 : index
    %0 = vector.load %arg1[%c0, %c0_0] : memref<8x128xbf16, #tpu.memory_space<vmem>>, vector<8x128xbf16>
    %c0_1 = arith.constant 0 : index
    %c0_2 = arith.constant 0 : index
    %1 = vector.load %arg2[%c0_1, %c0_2] : memref<128x128xbf16, #tpu.memory_space<vmem>>, vector<128x128xbf16>
    %cst = arith.constant dense<0.000000e+00> : vector<8x128xf32>
    %2 = tpu.matmul %0, %1, %cst {dimension_numbers = #tpu.dot_dimension_numbers<[1], [0], [0], [1], [0, 0, 1, 1], [], []>} : vector<8x128xbf16>, vector<128x128xbf16>, vector<8x128xf32> -> vector<8x128xf32>
    %c0_3 = arith.constant 0 : index
    %c0_4 = arith.constant 0 : index
    %3 = vector.load %arg3[%c0_3, %c0_4] : memref<1x128xf32, #tpu.memory_space<vmem>>, vector<1x128xf32>
    %4 = vector.broadcast %3 : vector<1x128xf32> to vector<8x128xf32>
    %5 = arith.addf %2, %4 : vector<8x128xf32>
    %cst_5 = arith.constant 0.000000e+00 : f32
    %6 = vector.broadcast %cst_5 : f32 to vector<8x128xf32>
    %7 = arith.maximumf %5, %6 : vector<8x128xf32>
    %8 = arith.truncf %7 : vector<8x128xf32> to vector<8x128xbf16>
    %c0_6 = arith.constant 0 : index
    %c0_7 = arith.constant 0 : index
    %9 = vector.load %arg4[%c0_6, %c0_7] : memref<128x128xbf16, #tpu.memory_space<vmem>>, vector<128x128xbf16>
    %cst_8 = arith.constant dense<0.000000e+00> : vector<8x128xf32>
    %10 = tpu.matmul %8, %9, %cst_8 {dimension_numbers = #tpu.dot_dimension_numbers<[1], [0], [0], [1], [0, 0, 1, 1], [], []>} : vector<8x128xbf16>, vector<128x128xbf16>, vector<8x128xf32> -> vector<8x128xf32>
    %c0_9 = arith.constant 0 : index
    %c0_10 = arith.constant 0 : index
    %11 = vector.load %arg5[%c0_9, %c0_10] : memref<1x128xf32, #tpu.memory_space<vmem>>, vector<1x128xf32>
    %12 = vector.broadcast %11 : vector<1x128xf32> to vector<8x128xf32>
    %13 = arith.addf %10, %12 : vector<8x128xf32>
    %14 = arith.truncf %13 : vector<8x128xf32> to vector<8x128xbf16>
    %c0_11 = arith.constant 0 : index
    %c0_12 = arith.constant 0 : index
    %15 = vector.load %arg6[%c0_11, %c0_12] : memref<128x128xbf16, #tpu.memory_space<vmem>>, vector<128x128xbf16>
    %cst_13 = arith.constant dense<0.000000e+00> : vector<8x128xf32>
    %16 = tpu.matmul %14, %15, %cst_13 {dimension_numbers = #tpu.dot_dimension_numbers<[1], [0], [0], [1], [0, 0, 1, 1], [], []>} : vector<8x128xbf16>, vector<128x128xbf16>, vector<8x128xf32> -> vector<8x128xf32>
    %c0_14 = arith.constant 0 : index
    %c0_15 = arith.constant 0 : index
    %17 = vector.load %arg7[%c0_14, %c0_15] : memref<1x128xf32, #tpu.memory_space<vmem>>, vector<1x128xf32>
    %18 = vector.broadcast %17 : vector<1x128xf32> to vector<8x128xf32>
    %19 = arith.addf %16, %18 : vector<8x128xf32>
    %cst_16 = arith.constant 0.000000e+00 : f32
    %20 = vector.broadcast %cst_16 : f32 to vector<8x128xf32>
    %21 = arith.maximumf %19, %20 : vector<8x128xf32>
    %22 = arith.truncf %21 : vector<8x128xf32> to vector<8x128xbf16>
    %c0_17 = arith.constant 0 : index
    %c0_18 = arith.constant 0 : index
    %23 = vector.load %arg8[%c0_17, %c0_18] : memref<128x128xbf16, #tpu.memory_space<vmem>>, vector<128x128xbf16>
    %cst_19 = arith.constant dense<0.000000e+00> : vector<8x128xf32>
    %24 = tpu.matmul %22, %23, %cst_19 {dimension_numbers = #tpu.dot_dimension_numbers<[1], [0], [0], [1], [0, 0, 1, 1], [], []>} : vector<8x128xbf16>, vector<128x128xbf16>, vector<8x128xf32> -> vector<8x128xf32>
    %c0_20 = arith.constant 0 : index
    %c0_21 = arith.constant 0 : index
    %25 = vector.load %arg9[%c0_20, %c0_21] : memref<1x128xf32, #tpu.memory_space<vmem>>, vector<1x128xf32>
    %26 = vector.broadcast %25 : vector<1x128xf32> to vector<8x128xf32>
    %27 = arith.addf %24, %26 : vector<8x128xf32>
    %c0_22 = arith.constant 0 : index
    %c0_23 = arith.constant 0 : index
    %28 = vector.load %arg10[%c0_22, %c0_23] : memref<8x128xf32, #tpu.memory_space<vmem>>, vector<8x128xf32>
    tpu.vector_store %arg10[%c0_22, %c0_23], %13 {strides = array<i32>} : memref<8x128xf32, #tpu.memory_space<vmem>>, vector<8x128xf32>,
    %c0_24 = arith.constant 0 : index
    %c0_25 = arith.constant 0 : index
    %29 = vector.load %arg11[%c0_24, %c0_25] : memref<8x128xf32, #tpu.memory_space<vmem>>, vector<8x128xf32>
    tpu.vector_store %arg11[%c0_24, %c0_25], %27 {strides = array<i32>} : memref<8x128xf32, #tpu.memory_space<vmem>>, vector<8x128xf32>,
    return
  }
  func.func @transform_0(%arg0: i32) -> (i32, i32) {
    %c0_i32 = arith.constant 0 : i32
    %c0_i32_0 = arith.constant 0 : i32
    return %arg0, %c0_i32 : i32, i32
  }
  func.func @transform_1(%arg0: i32) -> (i32, i32) {
    %c0_i32 = arith.constant 0 : i32
    %c0_i32_0 = arith.constant 0 : i32
    %c0_i32_1 = arith.constant 0 : i32
    return %c0_i32, %c0_i32_0 : i32, i32
  }
  func.func @transform_2(%arg0: i32) -> (i32, i32) {
    %c0_i32 = arith.constant 0 : i32
    %c0_i32_0 = arith.constant 0 : i32
    %c0_i32_1 = arith.constant 0 : i32
    return %c0_i32, %c0_i32_0 : i32, i32
  }
  func.func @transform_3(%arg0: i32) -> (i32, i32) {
    %c0_i32 = arith.constant 0 : i32
    %c0_i32_0 = arith.constant 0 : i32
    %c0_i32_1 = arith.constant 0 : i32
    return %c0_i32, %c0_i32_0 : i32, i32
  }
  func.func @transform_4(%arg0: i32) -> (i32, i32) {
    %c0_i32 = arith.constant 0 : i32
    %c0_i32_0 = arith.constant 0 : i32
    %c0_i32_1 = arith.constant 0 : i32
    return %c0_i32, %c0_i32_0 : i32, i32
  }
  func.func @transform_5(%arg0: i32) -> (i32, i32) {
    %c0_i32 = arith.constant 0 : i32
    %c0_i32_0 = arith.constant 0 : i32
    %c0_i32_1 = arith.constant 0 : i32
    return %c0_i32, %c0_i32_0 : i32, i32
  }
  func.func @transform_6(%arg0: i32) -> (i32, i32) {
    %c0_i32 = arith.constant 0 : i32
    %c0_i32_0 = arith.constant 0 : i32
    %c0_i32_1 = arith.constant 0 : i32
    return %c0_i32, %c0_i32_0 : i32, i32
  }
  func.func @transform_7(%arg0: i32) -> (i32, i32) {
    %c0_i32 = arith.constant 0 : i32
    %c0_i32_0 = arith.constant 0 : i32
    %c0_i32_1 = arith.constant 0 : i32
    return %c0_i32, %c0_i32_0 : i32, i32
  }
  func.func @transform_8(%arg0: i32) -> (i32, i32) {
    %c0_i32 = arith.constant 0 : i32
    %c0_i32_0 = arith.constant 0 : i32
    %c0_i32_1 = arith.constant 0 : i32
    return %c0_i32, %c0_i32_0 : i32, i32
  }
  func.func @transform_9(%arg0: i32) -> (i32, i32) {
    %c0_i32 = arith.constant 0 : i32
    %c0_i32_0 = arith.constant 0 : i32
    return %arg0, %c0_i32 : i32, i32
  }
  func.func @transform_10(%arg0: i32) -> (i32, i32) {
    %c0_i32 = arith.constant 0 : i32
    %c0_i32_0 = arith.constant 0 : i32
    return %arg0, %c0_i32 : i32, i32
  }
}

module attributes {stable_mosaic.version = 11 : i64} {
  func.func @autoencoder_kernel(%arg0: i32, %arg1: memref<8x128xbf16, #tpu.memory_space<vmem>>, %arg2: memref<128x128xbf16, #tpu.memory_space<vmem>>, %arg3: memref<1x128xf32, #tpu.memory_space<vmem>>, %arg4: memref<128x128xbf16, #tpu.memory_space<vmem>>, %arg5: memref<1x128xf32, #tpu.memory_space<vmem>>, %arg6: memref<128x128xbf16, #tpu.memory_space<vmem>>, %arg7: memref<1x128xf32, #tpu.memory_space<vmem>>, %arg8: memref<128x128xbf16, #tpu.memory_space<vmem>>, %arg9: memref<1x128xf32, #tpu.memory_space<vmem>>, %arg10: memref<8x128xf32, #tpu.memory_space<vmem>>, %arg11: memref<8x128xf32, #tpu.memory_space<vmem>>) attributes {dimension_semantics = [#tpu.dimension_semantics<parallel>], iteration_bounds = array<i64: 2>, scalar_prefetch = 0 : i64, scratch_operands = 0 : i64, tpu.core_type = #tpu.core_type<tc>, window_params = [{transform_indices = @transform_0, window_bounds = array<i64: 8, 128>}, {pipeline_mode = #tpu.pipeline_mode<synchronous>, transform_indices = @transform_1, window_bounds = array<i64: 128, 128>}, {pipeline_mode = #tpu.pipeline_mode<synchronous>, transform_indices = @transform_2, window_bounds = array<i64: 1, 128>}, {pipeline_mode = #tpu.pipeline_mode<synchronous>, transform_indices = @transform_3, window_bounds = array<i64: 128, 128>}, {pipeline_mode = #tpu.pipeline_mode<synchronous>, transform_indices = @transform_4, window_bounds = array<i64: 1, 128>}, {pipeline_mode = #tpu.pipeline_mode<synchronous>, transform_indices = @transform_5, window_bounds = array<i64: 128, 128>}, {pipeline_mode = #tpu.pipeline_mode<synchronous>, transform_indices = @transform_6, window_bounds = array<i64: 1, 128>}, {pipeline_mode = #tpu.pipeline_mode<synchronous>, transform_indices = @transform_7, window_bounds = array<i64: 128, 128>}, {pipeline_mode = #tpu.pipeline_mode<synchronous>, transform_indices = @transform_8, window_bounds = array<i64: 1, 128>}, {transform_indices = @transform_9, window_bounds = array<i64: 8, 128>}, {transform_indices = @transform_10, window_bounds = array<i64: 8, 128>}]} {
    %c0 = arith.constant 0 : index
    %c0_0 = arith.constant 0 : index
    %0 = vector.load %arg1[%c0, %c0_0] : memref<8x128xbf16, #tpu.memory_space<vmem>>, vector<8x128xbf16>
    %c0_1 = arith.constant 0 : index
    %c0_2 = arith.constant 0 : index
    %1 = vector.load %arg2[%c0_1, %c0_2] : memref<128x128xbf16, #tpu.memory_space<vmem>>, vector<128x128xbf16>
    %cst = arith.constant dense<0.000000e+00> : vector<8x128xf32>
    %2 = tpu.matmul %0, %1, %cst {dimension_numbers = #tpu.dot_dimension_numbers<[1], [0], [0], [1], [0, 0, 1, 1], [], []>} : vector<8x128xbf16>, vector<128x128xbf16>, vector<8x128xf32> -> vector<8x128xf32>
    %c0_3 = arith.constant 0 : index
    %c0_4 = arith.constant 0 : index
    %3 = vector.load %arg3[%c0_3, %c0_4] : memref<1x128xf32, #tpu.memory_space<vmem>>, vector<1x128xf32>
    %4 = vector.broadcast %3 : vector<1x128xf32> to vector<8x128xf32>
    %5 = arith.addf %2, %4 : vector<8x128xf32>
    %cst_5 = arith.constant 0.000000e+00 : f32
    %6 = vector.broadcast %cst_5 : f32 to vector<8x128xf32>
    %7 = arith.maximumf %5, %6 : vector<8x128xf32>
    %8 = arith.truncf %7 : vector<8x128xf32> to vector<8x128xbf16>
    %c0_6 = arith.constant 0 : index
    %c0_7 = arith.constant 0 : index
    %9 = vector.load %arg4[%c0_6, %c0_7] : memref<128x128xbf16, #tpu.memory_space<vmem>>, vector<128x128xbf16>
    %cst_8 = arith.constant dense<0.000000e+00> : vector<8x128xf32>
    %10 = tpu.matmul %8, %9, %cst_8 {dimension_numbers = #tpu.dot_dimension_numbers<[1], [0], [0], [1], [0, 0, 1, 1], [], []>} : vector<8x128xbf16>, vector<128x128xbf16>, vector<8x128xf32> -> vector<8x128xf32>
    %c0_9 = arith.constant 0 : index
    %c0_10 = arith.constant 0 : index
    %11 = vector.load %arg5[%c0_9, %c0_10] : memref<1x128xf32, #tpu.memory_space<vmem>>, vector<1x128xf32>
    %12 = vector.broadcast %11 : vector<1x128xf32> to vector<8x128xf32>
    %13 = arith.addf %10, %12 : vector<8x128xf32>
    %14 = arith.truncf %13 : vector<8x128xf32> to vector<8x128xbf16>
    %c0_11 = arith.constant 0 : index
    %c0_12 = arith.constant 0 : index
    %15 = vector.load %arg6[%c0_11, %c0_12] : memref<128x128xbf16, #tpu.memory_space<vmem>>, vector<128x128xbf16>
    %cst_13 = arith.constant dense<0.000000e+00> : vector<8x128xf32>
    %16 = tpu.matmul %14, %15, %cst_13 {dimension_numbers = #tpu.dot_dimension_numbers<[1], [0], [0], [1], [0, 0, 1, 1], [], []>} : vector<8x128xbf16>, vector<128x128xbf16>, vector<8x128xf32> -> vector<8x128xf32>
    %c0_14 = arith.constant 0 : index
    %c0_15 = arith.constant 0 : index
    %17 = vector.load %arg7[%c0_14, %c0_15] : memref<1x128xf32, #tpu.memory_space<vmem>>, vector<1x128xf32>
    %18 = vector.broadcast %17 : vector<1x128xf32> to vector<8x128xf32>
    %19 = arith.addf %16, %18 : vector<8x128xf32>
    %cst_16 = arith.constant 0.000000e+00 : f32
    %20 = vector.broadcast %cst_16 : f32 to vector<8x128xf32>
    %21 = arith.maximumf %19, %20 : vector<8x128xf32>
    %22 = arith.truncf %21 : vector<8x128xf32> to vector<8x128xbf16>
    %c0_17 = arith.constant 0 : index
    %c0_18 = arith.constant 0 : index
    %23 = vector.load %arg8[%c0_17, %c0_18] : memref<128x128xbf16, #tpu.memory_space<vmem>>, vector<128x128xbf16>
    %cst_19 = arith.constant dense<0.000000e+00> : vector<8x128xf32>
    %24 = tpu.matmul %22, %23, %cst_19 {dimension_numbers = #tpu.dot_dimension_numbers<[1], [0], [0], [1], [0, 0, 1, 1], [], []>} : vector<8x128xbf16>, vector<128x128xbf16>, vector<8x128xf32> -> vector<8x128xf32>
    %c0_20 = arith.constant 0 : index
    %c0_21 = arith.constant 0 : index
    %25 = vector.load %arg9[%c0_20, %c0_21] : memref<1x128xf32, #tpu.memory_space<vmem>>, vector<1x128xf32>
    %26 = vector.broadcast %25 : vector<1x128xf32> to vector<8x128xf32>
    %27 = arith.addf %24, %26 : vector<8x128xf32>
    %c0_22 = arith.constant 0 : index
    %c0_23 = arith.constant 0 : index
    %28 = vector.load %arg10[%c0_22, %c0_23] : memref<8x128xf32, #tpu.memory_space<vmem>>, vector<8x128xf32>
    tpu.vector_store %arg10[%c0_22, %c0_23], %13 {strides = array<i32>} : memref<8x128xf32, #tpu.memory_space<vmem>>, vector<8x128xf32>,
    %c0_24 = arith.constant 0 : index
    %c0_25 = arith.constant 0 : index
    %29 = vector.load %arg11[%c0_24, %c0_25] : memref<8x128xf32, #tpu.memory_space<vmem>>, vector<8x128xf32>
    tpu.vector_store %arg11[%c0_24, %c0_25], %27 {strides = array<i32>} : memref<8x128xf32, #tpu.memory_space<vmem>>, vector<8x128xf32>,
    return
  }
  func.func @transform_0(%arg0: i32) -> (i32, i32) {
    %c0_i32 = arith.constant 0 : i32
    %c0_i32_0 = arith.constant 0 : i32
    return %arg0, %c0_i32 : i32, i32
  }
  func.func @transform_1(%arg0: i32) -> (i32, i32) {
    %c0_i32 = arith.constant 0 : i32
    %c0_i32_0 = arith.constant 0 : i32
    %c0_i32_1 = arith.constant 0 : i32
    return %c0_i32, %c0_i32_0 : i32, i32
  }
  func.func @transform_2(%arg0: i32) -> (i32, i32) {
    %c0_i32 = arith.constant 0 : i32
    %c0_i32_0 = arith.constant 0 : i32
    %c0_i32_1 = arith.constant 0 : i32
    return %c0_i32, %c0_i32_0 : i32, i32
  }
  func.func @transform_3(%arg0: i32) -> (i32, i32) {
    %c0_i32 = arith.constant 0 : i32
    %c0_i32_0 = arith.constant 0 : i32
    %c0_i32_1 = arith.constant 0 : i32
    return %c0_i32, %c0_i32_0 : i32, i32
  }
  func.func @transform_4(%arg0: i32) -> (i32, i32) {
    %c0_i32 = arith.constant 0 : i32
    %c0_i32_0 = arith.constant 0 : i32
    %c0_i32_1 = arith.constant 0 : i32
    return %c0_i32, %c0_i32_0 : i32, i32
  }
  func.func @transform_5(%arg0: i32) -> (i32, i32) {
    %c0_i32 = arith.constant 0 : i32
    %c0_i32_0 = arith.constant 0 : i32
    %c0_i32_1 = arith.constant 0 : i32
    return %c0_i32, %c0_i32_0 : i32, i32
  }
  func.func @transform_6(%arg0: i32) -> (i32, i32) {
    %c0_i32 = arith.constant 0 : i32
    %c0_i32_0 = arith.constant 0 : i32
    %c0_i32_1 = arith.constant 0 : i32
    return %c0_i32, %c0_i32_0 : i32, i32
  }
  func.func @transform_7(%arg0: i32) -> (i32, i32) {
    %c0_i32 = arith.constant 0 : i32
    %c0_i32_0 = arith.constant 0 : i32
    %c0_i32_1 = arith.constant 0 : i32
    return %c0_i32, %c0_i32_0 : i32, i32
  }
  func.func @transform_8(%arg0: i32) -> (i32, i32) {
    %c0_i32 = arith.constant 0 : i32
    %c0_i32_0 = arith.constant 0 : i32
    %c0_i32_1 = arith.constant 0 : i32
    return %c0_i32, %c0_i32_0 : i32, i32
  }
  func.func @transform_9(%arg0: i32) -> (i32, i32) {
    %c0_i32 = arith.constant 0 : i32
    %c0_i32_0 = arith.constant 0 : i32
    return %arg0, %c0_i32 : i32, i32
  }
  func.func @transform_10(%arg0: i32) -> (i32, i32) {
    %c0_i32 = arith.constant 0 : i32
    %c0_i32_0 = arith.constant 0 : i32
    return %arg0, %c0_i32 : i32, i32
  }
}

</mosaic_0001>

<llo_original>
// kernel: autoencoder_forward.1
$region0: #{autoencoder_forward.1}
  #allocation0 [shape = 'u32[]', space=smem, size = 0x4, offset = 0x4, fixed_abs, tag = 'smem constant byte address 0x4 - core index']
  #allocation1 [shape = 'u32[72,128]{1,0:T(1,128)}', space=vmem, size = 0x9000, scoped, tag = 'internal scratch']
  %s0 = inlined_call_operand.vmem [shape: bf16[16,128], index: 0, kind: input, shape index: {}]
  %s1 = inlined_call_operand.hbm [shape: bf16[128,128], index: 1, kind: input, shape index: {}]
  %s2 = inlined_call_operand.vmem [shape: f32[1,128], index: 2, kind: input, shape index: {}]
  %s3 = inlined_call_operand.hbm [shape: bf16[128,128], index: 3, kind: input, shape index: {}]
  %s4 = inlined_call_operand.vmem [shape: f32[1,128], index: 4, kind: input, shape index: {}]
  %s5 = inlined_call_operand.hbm [shape: bf16[128,128], index: 5, kind: input, shape index: {}]
  %s6 = inlined_call_operand.vmem [shape: f32[1,128], index: 6, kind: input, shape index: {}]
  %s7 = inlined_call_operand.hbm [shape: bf16[128,128], index: 7, kind: input, shape index: {}]
  %s8 = inlined_call_operand.vmem [shape: f32[1,128], index: 8, kind: input, shape index: {}]
  %s9 = inlined_call_operand.hbm [shape: f32[16,128], index: 9, kind: output, shape index: {0}]
  %s10 = inlined_call_operand.hbm [shape: f32[16,128], index: 10, kind: output, shape index: {1}]
  %11 = xla_tuple %s9, %s10
  %s12 = sld [smem:[#allocation0]]
  $region93: #{autoencoder_forward.1} parent=0
    _
  %s14 = ssub.s32 1, %s12
  %s15 = scalar_select 0, %s14, %s12
  $region1: #{autoencoder_forward.1} parent=0
    #allocation2 [shape = 'u8[32768]{0}', space=vmem, size = 0x8000, scoped, tag = 'input window, operand 1, single buffered']
    #allocation3 [shape = 's32[2]{0}', space=sflag, size = 0x8, scoped, tag = 'scoped memory for autoencoder_forward.1']
    #allocation4 [shape = 's32[2]{0}', space=sflag, size = 0x8, scoped, tag = 'scoped memory for autoencoder_forward.1']
    #allocation5 [shape = 'u8[32768]{0}', space=vmem, size = 0x8000, scoped, tag = 'input window, operand 3, single buffered']
    #allocation6 [shape = 's32[1]{0}', space=sflag, size = 0x4, scoped, tag = 'scoped memory for autoencoder_forward.1']
    #allocation7 [shape = 'u8[32768]{0}', space=vmem, size = 0x8000, scoped, tag = 'input window, operand 5, single buffered']
    #allocation8 [shape = 'u8[32768]{0}', space=vmem, size = 0x8000, scoped, tag = 'input window, operand 7, single buffered']
    #allocation9 [shape = 's32[1]{0}', space=sflag, size = 0x4, scoped, tag = 'scoped memory for autoencoder_forward.1']
    #allocation10 [shape = 'u8[8192]{0}', space=vmem, size = 0x2000, scoped, tag = 'output window, operand 0']
    #allocation11 [shape = 'u8[8192]{0}', space=vmem, size = 0x2000, scoped, tag = 'output window, operand 1']
    #allocation12 [shape = 's32[2]{0}', space=sflag, size = 0x8, scoped, tag = 'scoped memory for autoencoder_forward.1']
    %16 = vsyncpa [#allocation3], 0
    %17 = vsyncpa [#allocation6], 0
    %18 = vsyncpa [#allocation9], 0
    %19 = vsyncpa [#allocation4], 0
    %s20 = scalar_lea.sflag [#allocation4], 1
    %21 = vsyncpa %s20, 0
    %22 = vsyncpa [#allocation12], 0
    %s23 = scalar_lea.sflag [#allocation12], 1
    %24 = vsyncpa %s23, 0
    loop: start=0, step=1, limit=4
    $region2: #{autoencoder_forward.1} parent=1 // loop_pre_header
      _
    $region3: #{autoencoder_forward.1} parent=1 // loop_header
      %s26 = sphi 0, %s30
      %p27 = scmp.ge.s32.totalorder %s26, 4
      %s36 = sphi 0, %s38
      %s39 = sphi 0, %s36
      %s40 = sphi 0, %s39
      %s56 = sphi 0, %s40
      %s60 = sphi 0, %s60
      %s62 = sphi 0, %s60
      %s63 = sphi 0, %s62
      %s77 = sphi 0, %s63
      %s81 = sphi 0, %s81
      %s83 = sphi 0, %s81
      %s84 = sphi 0, %s83
      %s98 = sphi 0, %s84
      %s102 = sphi 0, %s102
      %s104 = sphi 0, %s102
      %s105 = sphi 0, %s104
      %s119 = sphi 0, %s105
      %s123 = sphi 0, %s123
      %s125 = sphi 0, %s123
      %s126 = sphi 0, %s125
      %s140 = sphi 0, %s126
      %s144 = sphi 0, %s144
      %s146 = sphi 0, %s144
      %s147 = sphi 0, %s146
      %s161 = sphi 0, %s147
      %s165 = sphi 0, %s165
      %s167 = sphi 0, %s165
      %s168 = sphi 0, %s167
      %s182 = sphi 0, %s168
      %s186 = sphi 0, %s186
      %s188 = sphi 0, %s186
      %s189 = sphi 0, %s188
      %s203 = sphi 0, %s189
      %s207 = sphi 0, %s207
      %s209 = sphi 0, %s207
      %s210 = sphi 0, %s209
      %s224 = sphi 0, %s210
      %s230 = sphi 0, %s232
      %s233 = sphi 0, %s230
      %s234 = sphi 0, %s233
      %s250 = sphi 0, %s234
      %s256 = sphi 0, %s258
      %s259 = sphi 0, %s256
      %s260 = sphi 0, %s259
      %s276 = sphi 0, %s260
    $region4: #{autoencoder_forward.1} parent=1 // loop_header_branch
      %29 = sbr.rel (%p27) target = $region8
    $region5: #{autoencoder_forward.1} parent=1 // loop_body
      %s31 = ssub.s32 %s26, 1
      %s32 = ssub.s32 %s26, 2
      %s33 = sadd.s32 %s26, 1
      %s34 = ssub.s32 %s26, %s33
      %p35 = scmp.eq.s32.totalorder %s34, 0
      %s37 = sadd.s32 %s36, 1
      %s38 = scalar_select %p35, %s36, %s37
      %p41 = pneg %p35
      %p42 = scmp.eq.s32.totalorder %s26, 1
      %p43 = por %p41, %p42
      %p44 = scmp.ne.s32.totalorder %s36, %s39
      %p45 = scmp.eq.s32.totalorder %s26, 0
      %p46 = por %p44, %p45
      %p47 = scmp.ne.s32.totalorder %s36, %s39
      %p48 = scmp.eq.s32.totalorder %s31, 1
      %p49 = por %p47, %p48
      %p50 = scmp.ne.s32.totalorder %s39, %s40
      %p51 = scmp.eq.s32.totalorder %s31, 0
      %p52 = por %p50, %p51
      %p53 = scmp.ne.s32.totalorder %s39, %s40
      %p54 = scmp.eq.s32.totalorder %s32, 1
      %p55 = por %p53, %p54
      %p57 = scmp.ne.s32.totalorder %s40, %s56
      %p58 = scmp.eq.s32.totalorder %s32, 0
      %p59 = por %p57, %p58
      %s61 = sadd.s32 %s60, 1
      %p64 = scmp.eq.s32.totalorder %s26, 1
      %p65 = scmp.ne.s32.totalorder %s60, %s62
      %p66 = scmp.eq.s32.totalorder %s26, 0
      %p67 = por %p65, %p66
      %p68 = scmp.ne.s32.totalorder %s60, %s62
      %p69 = scmp.eq.s32.totalorder %s31, 1
      %p70 = por %p68, %p69
      %p71 = scmp.ne.s32.totalorder %s62, %s63
      %p72 = scmp.eq.s32.totalorder %s31, 0
      %p73 = por %p71, %p72
      %p74 = scmp.ne.s32.totalorder %s62, %s63
      %p75 = scmp.eq.s32.totalorder %s32, 1
      %p76 = por %p74, %p75
      %p78 = scmp.ne.s32.totalorder %s63, %s77
      %p79 = scmp.eq.s32.totalorder %s32, 0
      %p80 = por %p78, %p79
      %s82 = sadd.s32 %s81, 1
      %p85 = scmp.eq.s32.totalorder %s26, 1
      %p86 = scmp.ne.s32.totalorder %s81, %s83
      %p87 = scmp.eq.s32.totalorder %s26, 0
      %p88 = por %p86, %p87
      %p89 = scmp.ne.s32.totalorder %s81, %s83
      %p90 = scmp.eq.s32.totalorder %s31, 1
      %p91 = por %p89, %p90
      %p92 = scmp.ne.s32.totalorder %s83, %s84
      %p93 = scmp.eq.s32.totalorder %s31, 0
      %p94 = por %p92, %p93
      %p95 = scmp.ne.s32.totalorder %s83, %s84
      %p96 = scmp.eq.s32.totalorder %s32, 1
      %p97 = por %p95, %p96
      %p99 = scmp.ne.s32.totalorder %s84, %s98
      %p100 = scmp.eq.s32.totalorder %s32, 0
      %p101 = por %p99, %p100
      %s103 = sadd.s32 %s102, 1
      %p106 = scmp.eq.s32.totalorder %s26, 1
      %p107 = scmp.ne.s32.totalorder %s102, %s104
      %p108 = scmp.eq.s32.totalorder %s26, 0
      %p109 = por %p107, %p108
      %p110 = scmp.ne.s32.totalorder %s102, %s104
      %p111 = scmp.eq.s32.totalorder %s31, 1
      %p112 = por %p110, %p111
      %p113 = scmp.ne.s32.totalorder %s104, %s105
      %p114 = scmp.eq.s32.totalorder %s31, 0
      %p115 = por %p113, %p114
      %p116 = scmp.ne.s32.totalorder %s104, %s105
      %p117 = scmp.eq.s32.totalorder %s32, 1
      %p118 = por %p116, %p117
      %p120 = scmp.ne.s32.totalorder %s105, %s119
      %p121 = scmp.eq.s32.totalorder %s32, 0
      %p122 = por %p120, %p121
      %s124 = sadd.s32 %s123, 1
      %p127 = scmp.eq.s32.totalorder %s26, 1
      %p128 = scmp.ne.s32.totalorder %s123, %s125
      %p129 = scmp.eq.s32.totalorder %s26, 0
      %p130 = por %p128, %p129
      %p131 = scmp.ne.s32.totalorder %s123, %s125
      %p132 = scmp.eq.s32.totalorder %s31, 1
      %p133 = por %p131, %p132
      %p134 = scmp.ne.s32.totalorder %s125, %s126
      %p135 = scmp.eq.s32.totalorder %s31, 0
      %p136 = por %p134, %p135
      %p137 = scmp.ne.s32.totalorder %s125, %s126
      %p138 = scmp.eq.s32.totalorder %s32, 1
      %p139 = por %p137, %p138
      %p141 = scmp.ne.s32.totalorder %s126, %s140
      %p142 = scmp.eq.s32.totalorder %s32, 0
      %p143 = por %p141, %p142
      %s145 = sadd.s32 %s144, 1
      %p148 = scmp.eq.s32.totalorder %s26, 1
      %p149 = scmp.ne.s32.totalorder %s144, %s146
      %p150 = scmp.eq.s32.totalorder %s26, 0
      %p151 = por %p149, %p150
      %p152 = scmp.ne.s32.totalorder %s144, %s146
      %p153 = scmp.eq.s32.totalorder %s31, 1
      %p154 = por %p152, %p153
      %p155 = scmp.ne.s32.totalorder %s146, %s147
      %p156 = scmp.eq.s32.totalorder %s31, 0
      %p157 = por %p155, %p156
      %p158 = scmp.ne.s32.totalorder %s146, %s147
      %p159 = scmp.eq.s32.totalorder %s32, 1
      %p160 = por %p158, %p159
      %p162 = scmp.ne.s32.totalorder %s147, %s161
      %p163 = scmp.eq.s32.totalorder %s32, 0
      %p164 = por %p162, %p163
      %s166 = sadd.s32 %s165, 1
      %p169 = scmp.eq.s32.totalorder %s26, 1
      %p170 = scmp.ne.s32.totalorder %s165, %s167
      %p171 = scmp.eq.s32.totalorder %s26, 0
      %p172 = por %p170, %p171
      %p173 = scmp.ne.s32.totalorder %s165, %s167
      %p174 = scmp.eq.s32.totalorder %s31, 1
      %p175 = por %p173, %p174
      %p176 = scmp.ne.s32.totalorder %s167, %s168
      %p177 = scmp.eq.s32.totalorder %s31, 0
      %p178 = por %p176, %p177
      %p179 = scmp.ne.s32.totalorder %s167, %s168
      %p180 = scmp.eq.s32.totalorder %s32, 1
      %p181 = por %p179, %p180
      %p183 = scmp.ne.s32.totalorder %s168, %s182
      %p184 = scmp.eq.s32.totalorder %s32, 0
      %p185 = por %p183, %p184
      %s187 = sadd.s32 %s186, 1
      %p190 = scmp.eq.s32.totalorder %s26, 1
      %p191 = scmp.ne.s32.totalorder %s186, %s188
      %p192 = scmp.eq.s32.totalorder %s26, 0
      %p193 = por %p191, %p192
      %p194 = scmp.ne.s32.totalorder %s186, %s188
      %p195 = scmp.eq.s32.totalorder %s31, 1
      %p196 = por %p194, %p195
      %p197 = scmp.ne.s32.totalorder %s188, %s189
      %p198 = scmp.eq.s32.totalorder %s31, 0
      %p199 = por %p197, %p198
      %p200 = scmp.ne.s32.totalorder %s188, %s189
      %p201 = scmp.eq.s32.totalorder %s32, 1
      %p202 = por %p200, %p201
      %p204 = scmp.ne.s32.totalorder %s189, %s203
      %p205 = scmp.eq.s32.totalorder %s32, 0
      %p206 = por %p204, %p205
      %s208 = sadd.s32 %s207, 1
      %p211 = scmp.eq.s32.totalorder %s26, 1
      %p212 = scmp.ne.s32.totalorder %s207, %s209
      %p213 = scmp.eq.s32.totalorder %s26, 0
      %p214 = por %p212, %p213
      %p215 = scmp.ne.s32.totalorder %s207, %s209
      %p216 = scmp.eq.s32.totalorder %s31, 1
      %p217 = por %p215, %p216
      %p218 = scmp.ne.s32.totalorder %s209, %s210
      %p219 = scmp.eq.s32.totalorder %s31, 0
      %p220 = por %p218, %p219
      %p221 = scmp.ne.s32.totalorder %s209, %s210
      %p222 = scmp.eq.s32.totalorder %s32, 1
      %p223 = por %p221, %p222
      %p225 = scmp.ne.s32.totalorder %s210, %s224
      %p226 = scmp.eq.s32.totalorder %s32, 0
      %p227 = por %p225, %p226
      %s228 = ssub.s32 %s26, %s33
      %p229 = scmp.eq.s32.totalorder %s228, 0
      %s231 = sadd.s32 %s230, 1
      %s232 = scalar_select %p229, %s230, %s231
      %p235 = pneg %p229
      %p236 = scmp.eq.s32.totalorder %s26, 1
      %p237 = por %p235, %p236
      %p238 = scmp.ne.s32.totalorder %s230, %s233
      %p239 = scmp.eq.s32.totalorder %s26, 0
      %p240 = por %p238, %p239
      %p241 = scmp.ne.s32.totalorder %s230, %s233
      %p242 = scmp.eq.s32.totalorder %s31, 1
      %p243 = por %p241, %p242
      %p244 = scmp.ne.s32.totalorder %s233, %s234
      %p245 = scmp.eq.s32.totalorder %s31, 0
      %p246 = por %p244, %p245
      %p247 = scmp.ne.s32.totalorder %s233, %s234
      %p248 = scmp.eq.s32.totalorder %s32, 1
      %p249 = por %p247, %p248
      %p251 = scmp.ne.s32.totalorder %s234, %s250
      %p252 = scmp.eq.s32.totalorder %s32, 0
      %p253 = por %p251, %p252
      %s254 = ssub.s32 %s26, %s33
      %p255 = scmp.eq.s32.totalorder %s254, 0
      %s257 = sadd.s32 %s256, 1
      %s258 = scalar_select %p255, %s256, %s257
      %p261 = pneg %p255
      %p262 = scmp.eq.s32.totalorder %s26, 1
      %p263 = por %p261, %p262
      %p264 = scmp.ne.s32.totalorder %s256, %s259
      %p265 = scmp.eq.s32.totalorder %s26, 0
      %p266 = por %p264, %p265
      %p267 = scmp.ne.s32.totalorder %s256, %s259
      %p268 = scmp.eq.s32.totalorder %s31, 1
      %p269 = por %p267, %p268
      %p270 = scmp.ne.s32.totalorder %s259, %s260
      %p271 = scmp.eq.s32.totalorder %s31, 0
      %p272 = por %p270, %p271
      %p273 = scmp.ne.s32.totalorder %s259, %s260
      %p274 = scmp.eq.s32.totalorder %s32, 1
      %p275 = por %p273, %p274
      %p277 = scmp.ne.s32.totalorder %s260, %s276
      %p278 = scmp.eq.s32.totalorder %s32, 0
      %p279 = por %p277, %p278
      %p280 = scmp.le.s32.totalorder 1, %s26
      %p281 = scmp.lt.s32.totalorder %s26, 3
      %p282 = pnand %p280, %p281
      %p283 = pneg %p282
      // Predicated region
      $region9: #{autoencoder_forward.1} parent=5 // pred_check
        _
      $region10: #{autoencoder_forward.1} parent=5 // pred_check_branch
        %285 = sbr.rel (%p282) target = $region12
      $region11: #{autoencoder_forward.1} parent=5 // pred_region
        %s286 = ssub.s32 %s26, 1
        // Predicated region
        $region13: #{autoencoder_forward.1} parent=11 // pred_check
          %p287 = pneg %p73
        $region14: #{autoencoder_forward.1} parent=11 // pred_check_branch
          %289 = sbr.rel (%p287) target = $region16
        $region15: #{autoencoder_forward.1} parent=11 // pred_region
          %291 = vsyncadd [#allocation3], 0
          %s292 = sshll.u32 %s1, 4
          %s293 = int_to_ptr.hbm [resolvable:$true] %s292
          %s294 = sshll.u32 [#allocation2], 4
          %s295 = int_to_ptr.vmem [resolvable:$true] %s294
          %300 = dma.hbm_to_vmem [thread:$0]  %s293, 1024, %s295, [#allocation3], 64, 64, 4
        $region16: #{autoencoder_forward.1} parent=11 // pred_fallthru
          _
        // Predicated region
        $region17: #{autoencoder_forward.1} parent=11 // pred_check
          %p301 = pneg %p94
        $region18: #{autoencoder_forward.1} parent=11 // pred_check_branch
          %303 = sbr.rel (%p301) target = $region20
        $region19: #{autoencoder_forward.1} parent=11 // pred_region
          _
        $region20: #{autoencoder_forward.1} parent=11 // pred_fallthru
          _
        // Predicated region
        $region21: #{autoencoder_forward.1} parent=11 // pred_check
          %p304 = pneg %p115
        $region22: #{autoencoder_forward.1} parent=11 // pred_check_branch
          %306 = sbr.rel (%p304) target = $region24
        $region23: #{autoencoder_forward.1} parent=11 // pred_region
          %308 = vsyncadd [#allocation6], 0
          %s309 = sshll.u32 %s3, 4
          %s310 = int_to_ptr.hbm [resolvable:$true] %s309
          %s311 = sshll.u32 [#allocation5], 4
          %s312 = int_to_ptr.vmem [resolvable:$true] %s311
          %317 = dma.hbm_to_vmem [thread:$0]  %s310, 1024, %s312, [#allocation6], 64, 64, 4
        $region24: #{autoencoder_forward.1} parent=11 // pred_fallthru
          _
        // Predicated region
        $region25: #{autoencoder_forward.1} parent=11 // pred_check
          %p318 = pneg %p136
        $region26: #{autoencoder_forward.1} parent=11 // pred_check_branch
          %320 = sbr.rel (%p318) target = $region28
        $region27: #{autoencoder_forward.1} parent=11 // pred_region
          _
        $region28: #{autoencoder_forward.1} parent=11 // pred_fallthru
          _
        // Predicated region
        $region29: #{autoencoder_forward.1} parent=11 // pred_check
          %p321 = pneg %p157
        $region30: #{autoencoder_forward.1} parent=11 // pred_check_branch
          %323 = sbr.rel (%p321) target = $region32
        $region31: #{autoencoder_forward.1} parent=11 // pred_region
          %325 = vsyncadd [#allocation6], 0
          %s326 = sshll.u32 %s5, 4
          %s327 = int_to_ptr.hbm [resolvable:$true] %s326
          %s328 = sshll.u32 [#allocation7], 4
          %s329 = int_to_ptr.vmem [resolvable:$true] %s328
          %334 = dma.hbm_to_vmem [thread:$0]  %s327, 1024, %s329, [#allocation6], 64, 64, 4
        $region32: #{autoencoder_forward.1} parent=11 // pred_fallthru
          _
        // Predicated region
        $region33: #{autoencoder_forward.1} parent=11 // pred_check
          %p335 = pneg %p178
        $region34: #{autoencoder_forward.1} parent=11 // pred_check_branch
          %337 = sbr.rel (%p335) target = $region36
        $region35: #{autoencoder_forward.1} parent=11 // pred_region
          _
        $region36: #{autoencoder_forward.1} parent=11 // pred_fallthru
          _
        // Predicated region
        $region37: #{autoencoder_forward.1} parent=11 // pred_check
          %p338 = pneg %p199
        $region38: #{autoencoder_forward.1} parent=11 // pred_check_branch
          %340 = sbr.rel (%p338) target = $region40
        $region39: #{autoencoder_forward.1} parent=11 // pred_region
          %342 = vsyncadd [#allocation9], 0
          %s343 = sshll.u32 %s7, 4
          %s344 = int_to_ptr.hbm [resolvable:$true] %s343
          %s345 = sshll.u32 [#allocation8], 4
          %s346 = int_to_ptr.vmem [resolvable:$true] %s345
          %351 = dma.hbm_to_vmem [thread:$0]  %s344, 1024, %s346, [#allocation9], 64, 64, 4
        $region40: #{autoencoder_forward.1} parent=11 // pred_fallthru
          _
        // Predicated region
        $region41: #{autoencoder_forward.1} parent=11 // pred_check
          %p352 = pneg %p220
        $region42: #{autoencoder_forward.1} parent=11 // pred_check_branch
          %354 = sbr.rel (%p352) target = $region44
        $region43: #{autoencoder_forward.1} parent=11 // pred_region
          _
        $region44: #{autoencoder_forward.1} parent=11 // pred_fallthru
          _
      $region12: #{autoencoder_forward.1} parent=5 // pred_fallthru
        _
      %p355 = scmp.lt.s32.totalorder %s26, 2
      // Predicated region
      $region45: #{autoencoder_forward.1} parent=5 // pred_check
        %p356 = pneg %p355
      $region46: #{autoencoder_forward.1} parent=5 // pred_check_branch
        %358 = sbr.rel (%p356) target = $region48
      $region47: #{autoencoder_forward.1} parent=5 // pred_region
        // Predicated region
        $region49: #{autoencoder_forward.1} parent=47 // pred_check
          %p359 = pneg %p46
        $region50: #{autoencoder_forward.1} parent=47 // pred_check_branch
          %361 = sbr.rel (%p359) target = $region52
        $region51: #{autoencoder_forward.1} parent=47 // pred_region
          %p362 = scmp.lt.s32.totalorder %s26, 1
          %s363 = scalar_select %p362, %s26, 1
          %s364 = smul.addr %s363, 4
          %s365 = scalar_lea.vmem %s0, %s364
        $region52: #{autoencoder_forward.1} parent=47 // pred_fallthru
          _
      $region48: #{autoencoder_forward.1} parent=5 // pred_fallthru
        _
      %p366 = scmp.le.s32.totalorder 1, %s26
      %p367 = scmp.lt.s32.totalorder %s26, 3
      %p368 = pnand %p366, %p367
      %p369 = pneg %p368
      // Predicated region
      $region53: #{autoencoder_forward.1} parent=5 // pred_check
        _
      $region54: #{autoencoder_forward.1} parent=5 // pred_check_branch
        %371 = sbr.rel (%p368) target = $region56
      $region55: #{autoencoder_forward.1} parent=5 // pred_region
        %s372 = ssub.s32 %s26, 1
        // Predicated region
        $region57: #{autoencoder_forward.1} parent=55 // pred_check
          %p373 = pneg %p73
        $region58: #{autoencoder_forward.1} parent=55 // pred_check_branch
          %375 = sbr.rel (%p373) target = $region60
        $region59: #{autoencoder_forward.1} parent=55 // pred_region
          %377 = dma.done [#allocation3], 1024
        $region60: #{autoencoder_forward.1} parent=55 // pred_fallthru
          _
        // Predicated region
        $region61: #{autoencoder_forward.1} parent=55 // pred_check
          %p378 = pneg %p115
        $region62: #{autoencoder_forward.1} parent=55 // pred_check_branch
          %380 = sbr.rel (%p378) target = $region64
        $region63: #{autoencoder_forward.1} parent=55 // pred_region
          %382 = dma.done [#allocation6], 1024
        $region64: #{autoencoder_forward.1} parent=55 // pred_fallthru
          _
        // Predicated region
        $region65: #{autoencoder_forward.1} parent=55 // pred_check
          %p383 = pneg %p157
        $region66: #{autoencoder_forward.1} parent=55 // pred_check_branch
          %385 = sbr.rel (%p383) target = $region68
        $region67: #{autoencoder_forward.1} parent=55 // pred_region
          %387 = dma.done [#allocation6], 1024
        $region68: #{autoencoder_forward.1} parent=55 // pred_fallthru
          _
        // Predicated region
        $region69: #{autoencoder_forward.1} parent=55 // pred_check
          %p388 = pneg %p199
        $region70: #{autoencoder_forward.1} parent=55 // pred_check_branch
          %390 = sbr.rel (%p388) target = $region72
        $region71: #{autoencoder_forward.1} parent=55 // pred_region
          %392 = dma.done [#allocation9], 1024
        $region72: #{autoencoder_forward.1} parent=55 // pred_fallthru
          _
        %p393 = scmp.lt.s32.totalorder %s31, 1
        %s394 = scalar_select %p393, %s31, 1
        %s395 = smul.addr %s394, 4
        %s396 = scalar_lea.vmem %s0, %s395
        %p397 = pneg %p52
        %p398 = pneg %p49
        %p399 = pneg %p73
        %p400 = pneg %p70
        %p401 = pneg %p94
        %p402 = pneg %p91
        %p403 = pneg %p115
        %p404 = pneg %p112
        %p405 = pneg %p136
        %p406 = pneg %p133
        %p407 = pneg %p157
        %p408 = pneg %p154
        %p409 = pneg %p178
        %p410 = pneg %p175
        %p411 = pneg %p199
        %p412 = pneg %p196
        %p413 = pneg %p220
        %p414 = pneg %p217
        %p415 = pneg %p246
        %p416 = pneg %p243
        %s417 = sand.u32 %s233, 1
        %s418 = scalar_lea.sflag [#allocation4], %s417
        %s419 = sand.u32 %s233, 1
        %s420 = smul.addr %s419, 8
        %s421 = scalar_lea.vmem [#allocation10], %s420
        %p422 = pneg %p272
        %p423 = pneg %p269
        %s424 = sand.u32 %s259, 1
        %s425 = scalar_lea.sflag [#allocation12], %s424
        %s426 = sand.u32 %s259, 1
        %s427 = smul.addr %s426, 8
        %s428 = scalar_lea.vmem [#allocation11], %s427
        %p429 = scmp.lt.s32.totalorder %s31, 1
        %s430 = scalar_select %p429, %s31, 1
        %s431 = smul.addr %s430, 4
        %s432 = scalar_lea.vmem %s0, %s431
        %v433 = vld [vmem:[%s432] sm:$0xf]
        %v434 = vld [vmem:[#allocation2] sm:$0xf]
        %v435 = vld [vmem:[#allocation2 + $0x4] sm:$0xf]
        %v436 = vld [vmem:[#allocation2 + $0x8] sm:$0xf]
        %v437 = vld [vmem:[#allocation2 + $0xc] sm:$0xf]
        %v438 = vld [vmem:[#allocation2 + $0x10] sm:$0xf]
        %v439 = vld [vmem:[#allocation2 + $0x14] sm:$0xf]
        %v440 = vld [vmem:[#allocation2 + $0x18] sm:$0xf]
        %v441 = vld [vmem:[#allocation2 + $0x1c] sm:$0xf]
        %v442 = vld [vmem:[#allocation2 + $0x20] sm:$0xf]
        %v443 = vld [vmem:[#allocation2 + $0x24] sm:$0xf]
        %v444 = vld [vmem:[#allocation2 + $0x28] sm:$0xf]
        %v445 = vld [vmem:[#allocation2 + $0x2c] sm:$0xf]
        %v446 = vld [vmem:[#allocation2 + $0x30] sm:$0xf]
        %v447 = vld [vmem:[#allocation2 + $0x34] sm:$0xf]
        %v448 = vld [vmem:[#allocation2 + $0x38] sm:$0xf]
        %v449 = vld [vmem:[#allocation2 + $0x3c] sm:$0xf]
        %v450 = vld [vmem:[%s2] sm:$0x1]
        %v452 = vperm.slane %v450, 0
        %v470 = vunpack.c.l.b16 %v434
        %v471 = vunpack.c.l.b16 %v435
        %v472 = vunpack.c.l.b16 %v436
        %v473 = vunpack.c.l.b16 %v437
        %v474 = vunpack.c.l.b16 %v438
        %v475 = vunpack.c.l.b16 %v439
        %v476 = vunpack.c.l.b16 %v440
        %v477 = vunpack.c.l.b16 %v441
        %v478 = vunpack.c.l.b16 %v442
        %v479 = vunpack.c.l.b16 %v443
        %v480 = vunpack.c.l.b16 %v444
        %v481 = vunpack.c.l.b16 %v445
        %v482 = vunpack.c.l.b16 %v446
        %v483 = vunpack.c.l.b16 %v447
        %v484 = vunpack.c.l.b16 %v448
        %v485 = vunpack.c.l.b16 %v449
        %v486 = vpack.c.b16 %v471, %v470
        %v487 = vpack.c.b16 %v473, %v472
        %v488 = vpack.c.b16 %v475, %v474
        %v489 = vpack.c.b16 %v477, %v476
        %v490 = vpack.c.b16 %v479, %v478
        %v491 = vpack.c.b16 %v481, %v480
        %v492 = vpack.c.b16 %v483, %v482
        %v493 = vpack.c.b16 %v485, %v484
        %502 = vmatpush.bf16.msra.mxu0 %v493
        %503 = vmatpush.bf16.msra.mxu0 %v492
        %504 = vmatpush.bf16.msra.mxu0 %v491
        %505 = vmatpush.bf16.msra.mxu0 %v490
        %506 = vmatpush.bf16.msra.mxu0 %v489
        %507 = vmatpush.bf16.msra.mxu0 %v488
        %508 = vmatpush.bf16.msra.mxu0 %v487
        %509 = vmatpush.bf16.msra.mxu0 %v486
        %510 = vmatmul.bf16.gmra.mxu0 %v433
        %v511 = vpop.f32.mrf.mxu0
        %v512 = vadd.f32 %v452, %v511
        %v513 = vpop.f32.mrf.mxu0
        %514 = vdwg.mxu0
        %v515 = vmax.f32 %v512, 0.0
        %v516 = vpack.c.bf16 %v515, %v515
        %v517 = vld [vmem:[#allocation5] sm:$0xf]
        %v518 = vld [vmem:[#allocation5 + $0x4] sm:$0xf]
        %v519 = vld [vmem:[#allocation5 + $0x8] sm:$0xf]
        %v520 = vld [vmem:[#allocation5 + $0xc] sm:$0xf]
        %v521 = vld [vmem:[#allocation5 + $0x10] sm:$0xf]
        %v522 = vld [vmem:[#allocation5 + $0x14] sm:$0xf]
        %v523 = vld [vmem:[#allocation5 + $0x18] sm:$0xf]
        %v524 = vld [vmem:[#allocation5 + $0x1c] sm:$0xf]
        %v525 = vld [vmem:[#allocation5 + $0x20] sm:$0xf]
        %v526 = vld [vmem:[#allocation5 + $0x24] sm:$0xf]
        %v527 = vld [vmem:[#allocation5 + $0x28] sm:$0xf]
        %v528 = vld [vmem:[#allocation5 + $0x2c] sm:$0xf]
        %v529 = vld [vmem:[#allocation5 + $0x30] sm:$0xf]
        %v530 = vld [vmem:[#allocation5 + $0x34] sm:$0xf]
        %v531 = vld [vmem:[#allocation5 + $0x38] sm:$0xf]
        %v532 = vld [vmem:[#allocation5 + $0x3c] sm:$0xf]
        %v533 = vld [vmem:[%s4] sm:$0x1]
        %v535 = vperm.slane %v533, 0
        %v553 = vunpack.c.l.b16 %v517
        %v554 = vunpack.c.l.b16 %v518
        %v555 = vunpack.c.l.b16 %v519
        %v556 = vunpack.c.l.b16 %v520
        %v557 = vunpack.c.l.b16 %v521
        %v558 = vunpack.c.l.b16 %v522
        %v559 = vunpack.c.l.b16 %v523
        %v560 = vunpack.c.l.b16 %v524
        %v561 = vunpack.c.l.b16 %v525
        %v562 = vunpack.c.l.b16 %v526
        %v563 = vunpack.c.l.b16 %v527
        %v564 = vunpack.c.l.b16 %v528
        %v565 = vunpack.c.l.b16 %v529
        %v566 = vunpack.c.l.b16 %v530
        %v567 = vunpack.c.l.b16 %v531
        %v568 = vunpack.c.l.b16 %v532
        %v569 = vpack.c.b16 %v554, %v553
        %v570 = vpack.c.b16 %v556, %v555
        %v571 = vpack.c.b16 %v558, %v557
        %v572 = vpack.c.b16 %v560, %v559
        %v573 = vpack.c.b16 %v562, %v561
        %v574 = vpack.c.b16 %v564, %v563
        %v575 = vpack.c.b16 %v566, %v565
        %v576 = vpack.c.b16 %v568, %v567
        %585 = vmatpush.bf16.msra.mxu0 %v576
        %586 = vmatpush.bf16.msra.mxu0 %v575
        %587 = vmatpush.bf16.msra.mxu0 %v574
        %588 = vmatpush.bf16.msra.mxu0 %v573
        %589 = vmatpush.bf16.msra.mxu0 %v572
        %590 = vmatpush.bf16.msra.mxu0 %v571
        %591 = vmatpush.bf16.msra.mxu0 %v570
        %592 = vmatpush.bf16.msra.mxu0 %v569
        %593 = vmatmul.bf16.gmra.mxu0 %v516
        %v594 = vpop.f32.mrf.mxu0
        %v595 = vadd.f32 %v535, %v594
        %v596 = vpop.f32.mrf.mxu0
        %597 = vdwg.mxu0
        %v598 = vpack.c.bf16 %v595, %v595
        %v599 = vld [vmem:[#allocation7] sm:$0xf]
        %v600 = vld [vmem:[#allocation7 + $0x4] sm:$0xf]
        %v601 = vld [vmem:[#allocation7 + $0x8] sm:$0xf]
        %v602 = vld [vmem:[#allocation7 + $0xc] sm:$0xf]
        %v603 = vld [vmem:[#allocation7 + $0x10] sm:$0xf]
        %v604 = vld [vmem:[#allocation7 + $0x14] sm:$0xf]
        %v605 = vld [vmem:[#allocation7 + $0x18] sm:$0xf]
        %v606 = vld [vmem:[#allocation7 + $0x1c] sm:$0xf]
        %v607 = vld [vmem:[#allocation7 + $0x20] sm:$0xf]
        %v608 = vld [vmem:[#allocation7 + $0x24] sm:$0xf]
        %v609 = vld [vmem:[#allocation7 + $0x28] sm:$0xf]
        %v610 = vld [vmem:[#allocation7 + $0x2c] sm:$0xf]
        %v611 = vld [vmem:[#allocation7 + $0x30] sm:$0xf]
        %v612 = vld [vmem:[#allocation7 + $0x34] sm:$0xf]
        %v613 = vld [vmem:[#allocation7 + $0x38] sm:$0xf]
        %v614 = vld [vmem:[#allocation7 + $0x3c] sm:$0xf]
        %v615 = vld [vmem:[%s6] sm:$0x1]
        %v617 = vperm.slane %v615, 0
        %v635 = vunpack.c.l.b16 %v599
        %v636 = vunpack.c.l.b16 %v600
        %v637 = vunpack.c.l.b16 %v601
        %v638 = vunpack.c.l.b16 %v602
        %v639 = vunpack.c.l.b16 %v603
        %v640 = vunpack.c.l.b16 %v604
        %v641 = vunpack.c.l.b16 %v605
        %v642 = vunpack.c.l.b16 %v606
        %v643 = vunpack.c.l.b16 %v607
        %v644 = vunpack.c.l.b16 %v608
        %v645 = vunpack.c.l.b16 %v609
        %v646 = vunpack.c.l.b16 %v610
        %v647 = vunpack.c.l.b16 %v611
        %v648 = vunpack.c.l.b16 %v612
        %v649 = vunpack.c.l.b16 %v613
        %v650 = vunpack.c.l.b16 %v614
        %v651 = vpack.c.b16 %v636, %v635
        %v652 = vpack.c.b16 %v638, %v637
        %v653 = vpack.c.b16 %v640, %v639
        %v654 = vpack.c.b16 %v642, %v641
        %v655 = vpack.c.b16 %v644, %v643
        %v656 = vpack.c.b16 %v646, %v645
        %v657 = vpack.c.b16 %v648, %v647
        %v658 = vpack.c.b16 %v650, %v649
        %667 = vmatpush.bf16.msra.mxu0 %v658
        %668 = vmatpush.bf16.msra.mxu0 %v657
        %669 = vmatpush.bf16.msra.mxu0 %v656
        %670 = vmatpush.bf16.msra.mxu0 %v655
        %671 = vmatpush.bf16.msra.mxu0 %v654
        %672 = vmatpush.bf16.msra.mxu0 %v653
        %673 = vmatpush.bf16.msra.mxu0 %v652
        %674 = vmatpush.bf16.msra.mxu0 %v651
        %675 = vmatmul.bf16.gmra.mxu0 %v598
        %v676 = vpop.f32.mrf.mxu0
        %v677 = vadd.f32 %v617, %v676
        %v678 = vpop.f32.mrf.mxu0
        %679 = vdwg.mxu0
        %v680 = vmax.f32 %v677, 0.0
        %v681 = vpack.c.bf16 %v680, %v680
        %v682 = vld [vmem:[#allocation8] sm:$0xf]
        %v683 = vld [vmem:[#allocation8 + $0x4] sm:$0xf]
        %v684 = vld [vmem:[#allocation8 + $0x8] sm:$0xf]
        %v685 = vld [vmem:[#allocation8 + $0xc] sm:$0xf]
        %v686 = vld [vmem:[#allocation8 + $0x10] sm:$0xf]
        %v687 = vld [vmem:[#allocation8 + $0x14] sm:$0xf]
        %v688 = vld [vmem:[#allocation8 + $0x18] sm:$0xf]
        %v689 = vld [vmem:[#allocation8 + $0x1c] sm:$0xf]
        %v690 = vld [vmem:[#allocation8 + $0x20] sm:$0xf]
        %v691 = vld [vmem:[#allocation8 + $0x24] sm:$0xf]
        %v692 = vld [vmem:[#allocation8 + $0x28] sm:$0xf]
        %v693 = vld [vmem:[#allocation8 + $0x2c] sm:$0xf]
        %v694 = vld [vmem:[#allocation8 + $0x30] sm:$0xf]
        %v695 = vld [vmem:[#allocation8 + $0x34] sm:$0xf]
        %v696 = vld [vmem:[#allocation8 + $0x38] sm:$0xf]
        %v697 = vld [vmem:[#allocation8 + $0x3c] sm:$0xf]
        %v698 = vld [vmem:[%s8] sm:$0x1]
        %v700 = vperm.slane %v698, 0
        %v718 = vunpack.c.l.b16 %v682
        %v719 = vunpack.c.l.b16 %v683
        %v720 = vunpack.c.l.b16 %v684
        %v721 = vunpack.c.l.b16 %v685
        %v722 = vunpack.c.l.b16 %v686
        %v723 = vunpack.c.l.b16 %v687
        %v724 = vunpack.c.l.b16 %v688
        %v725 = vunpack.c.l.b16 %v689
        %v726 = vunpack.c.l.b16 %v690
        %v727 = vunpack.c.l.b16 %v691
        %v728 = vunpack.c.l.b16 %v692
        %v729 = vunpack.c.l.b16 %v693
        %v730 = vunpack.c.l.b16 %v694
        %v731 = vunpack.c.l.b16 %v695
        %v732 = vunpack.c.l.b16 %v696
        %v733 = vunpack.c.l.b16 %v697
        %v734 = vpack.c.b16 %v719, %v718
        %v735 = vpack.c.b16 %v721, %v720
        %v736 = vpack.c.b16 %v723, %v722
        %v737 = vpack.c.b16 %v725, %v724
        %v738 = vpack.c.b16 %v727, %v726
        %v739 = vpack.c.b16 %v729, %v728
        %v740 = vpack.c.b16 %v731, %v730
        %v741 = vpack.c.b16 %v733, %v732
        %750 = vmatpush.bf16.msra.mxu0 %v741
        %751 = vmatpush.bf16.msra.mxu0 %v740
        %752 = vmatpush.bf16.msra.mxu0 %v739
        %753 = vmatpush.bf16.msra.mxu0 %v738
        %754 = vmatpush.bf16.msra.mxu0 %v737
        %755 = vmatpush.bf16.msra.mxu0 %v736
        %756 = vmatpush.bf16.msra.mxu0 %v735
        %757 = vmatpush.bf16.msra.mxu0 %v734
        %758 = vmatmul.bf16.gmra.mxu0 %v681
        %v759 = vpop.f32.mrf.mxu0
        %v760 = vadd.f32 %v700, %v759
        %v761 = vpop.f32.mrf.mxu0
        %762 = vdwg.mxu0
        %763 = vst [vmem:[%s421] sm:$0xff] %v595
        %764 = vst [vmem:[%s428] sm:$0xff] %v760
        %s765 = sand.u32 %s233, 1
        %s766 = scalar_lea.sflag [#allocation4], %s765
        %s767 = sand.u32 %s233, 1
        %s768 = smul.addr %s767, 8
        %s769 = scalar_lea.vmem [#allocation10], %s768
        %s770 = sand.u32 %s259, 1
        %s771 = scalar_lea.sflag [#allocation12], %s770
        %s772 = sand.u32 %s259, 1
        %s773 = smul.addr %s772, 8
        %s774 = scalar_lea.vmem [#allocation11], %s773
        // Predicated region
        $region73: #{autoencoder_forward.1} parent=55 // pred_check
          %p775 = pneg %p243
        $region74: #{autoencoder_forward.1} parent=55 // pred_check_branch
          %777 = sbr.rel (%p775) target = $region76
        $region75: #{autoencoder_forward.1} parent=55 // pred_region
          %779 = vsyncadd %s766, 0
          %s780 = smul.addr %s31, 8
          %s781 = scalar_lea.hbm %s9, %s780
          %s783 = sshll.u32 %s769, 4
          %s784 = int_to_ptr.vmem [resolvable:$true] %s783
          %s785 = sshll.u32 %s781, 4
          %s786 = int_to_ptr.hbm [resolvable:$true] %s785
          %788 = dma.vmem_to_hbm [thread:$0]  %s784, 128, %s786, %s766
        $region76: #{autoencoder_forward.1} parent=55 // pred_fallthru
          _
        // Predicated region
        $region77: #{autoencoder_forward.1} parent=55 // pred_check
          %p789 = pneg %p269
        $region78: #{autoencoder_forward.1} parent=55 // pred_check_branch
          %791 = sbr.rel (%p789) target = $region80
        $region79: #{autoencoder_forward.1} parent=55 // pred_region
          %793 = vsyncadd %s771, 0
          %s794 = smul.addr %s31, 8
          %s795 = scalar_lea.hbm %s10, %s794
          %s797 = sshll.u32 %s774, 4
          %s798 = int_to_ptr.vmem [resolvable:$true] %s797
          %s799 = sshll.u32 %s795, 4
          %s800 = int_to_ptr.hbm [resolvable:$true] %s799
          %802 = dma.vmem_to_hbm [thread:$0]  %s798, 128, %s800, %s771
        $region80: #{autoencoder_forward.1} parent=55 // pred_fallthru
          _
      $region56: #{autoencoder_forward.1} parent=5 // pred_fallthru
        _
      %p803 = scmp.le.s32.totalorder 2, %s26
      // Predicated region
      $region81: #{autoencoder_forward.1} parent=5 // pred_check
        %p804 = pneg %p803
      $region82: #{autoencoder_forward.1} parent=5 // pred_check_branch
        %806 = sbr.rel (%p804) target = $region84
      $region83: #{autoencoder_forward.1} parent=5 // pred_region
        %s807 = ssub.s32 %s26, 2
        // Predicated region
        $region85: #{autoencoder_forward.1} parent=83 // pred_check
          %p808 = pneg %p249
        $region86: #{autoencoder_forward.1} parent=83 // pred_check_branch
          %810 = sbr.rel (%p808) target = $region88
        $region87: #{autoencoder_forward.1} parent=83 // pred_region
          %s811 = sand.u32 %s234, 1
          %s812 = scalar_lea.sflag [#allocation4], %s811
          %s813 = sand.u32 %s234, 1
          %s814 = smul.addr %s813, 8
          %s815 = scalar_lea.vmem [#allocation10], %s814
          %817 = dma.done %s812, 128
        $region88: #{autoencoder_forward.1} parent=83 // pred_fallthru
          _
        // Predicated region
        $region89: #{autoencoder_forward.1} parent=83 // pred_check
          %p818 = pneg %p275
        $region90: #{autoencoder_forward.1} parent=83 // pred_check_branch
          %820 = sbr.rel (%p818) target = $region92
        $region91: #{autoencoder_forward.1} parent=83 // pred_region
          %s821 = sand.u32 %s260, 1
          %s822 = scalar_lea.sflag [#allocation12], %s821
          %s823 = sand.u32 %s260, 1
          %s824 = smul.addr %s823, 8
          %s825 = scalar_lea.vmem [#allocation11], %s824
          %827 = dma.done %s822, 128
        $region92: #{autoencoder_forward.1} parent=83 // pred_fallthru
          _
      $region84: #{autoencoder_forward.1} parent=5 // pred_fallthru
        _
    $region6: #{autoencoder_forward.1} parent=1 // loop_footer
      %s30 = sadd.s32 1, %s26
    $region7: #{autoencoder_forward.1} parent=1 // loop_footer_branch
      %25 = sbr.rel target = $region3
    $region8: #{autoencoder_forward.1} parent=1 // loop_exit
      _
    %828 = vsyncpa [#allocation3], 1
    %s829 = scalar_lea.sflag [#allocation3], 1
    %830 = vsyncpa %s829, 1
    %831 = vsyncpa [#allocation6], 1
    %832 = vsyncpa [#allocation9], 1
    %833 = vsyncpa [#allocation4], 1
    %s834 = scalar_lea.sflag [#allocation4], 1
    %835 = vsyncpa %s834, 1
    %836 = vsyncpa [#allocation12], 1
    %s837 = scalar_lea.sflag [#allocation12], 1
    %838 = vsyncpa %s837, 1

// kernel: autoencoder_forward.1
$region0: #{autoencoder_forward.1}
  #allocation0 [shape = 'u32[]', space=smem, size = 0x4, offset = 0x4, fixed_abs, tag = 'smem constant byte address 0x4 - core index']
  #allocation1 [shape = 'u32[72,128]{1,0:T(1,128)}', space=vmem, size = 0x9000, scoped, tag = 'internal scratch']
  %s0 = inlined_call_operand.vmem [shape: bf16[16,128], index: 0, kind: input, shape index: {}]
  %s1 = inlined_call_operand.hbm [shape: bf16[128,128], index: 1, kind: input, shape index: {}]
  %s2 = inlined_call_operand.vmem [shape: f32[1,128], index: 2, kind: input, shape index: {}]
  %s3 = inlined_call_operand.hbm [shape: bf16[128,128], index: 3, kind: input, shape index: {}]
  %s4 = inlined_call_operand.vmem [shape: f32[1,128], index: 4, kind: input, shape index: {}]
  %s5 = inlined_call_operand.hbm [shape: bf16[128,128], index: 5, kind: input, shape index: {}]
  %s6 = inlined_call_operand.vmem [shape: f32[1,128], index: 6, kind: input, shape index: {}]
  %s7 = inlined_call_operand.hbm [shape: bf16[128,128], index: 7, kind: input, shape index: {}]
  %s8 = inlined_call_operand.vmem [shape: f32[1,128], index: 8, kind: input, shape index: {}]
  %s9 = inlined_call_operand.hbm [shape: f32[16,128], index: 9, kind: output, shape index: {0}]
  %s10 = inlined_call_operand.hbm [shape: f32[16,128], index: 10, kind: output, shape index: {1}]
  %11 = xla_tuple %s9, %s10
  %s12 = sld [smem:[#allocation0]]
  $region93: #{autoencoder_forward.1} parent=0
    _
  %s14 = ssub.s32 1, %s12
  %s15 = scalar_select 0, %s14, %s12
  $region1: #{autoencoder_forward.1} parent=0
    #allocation2 [shape = 'u8[32768]{0}', space=vmem, size = 0x8000, scoped, tag = 'input window, operand 1, single buffered']
    #allocation3 [shape = 's32[2]{0}', space=sflag, size = 0x8, scoped, tag = 'scoped memory for autoencoder_forward.1']
    #allocation4 [shape = 's32[2]{0}', space=sflag, size = 0x8, scoped, tag = 'scoped memory for autoencoder_forward.1']
    #allocation5 [shape = 'u8[32768]{0}', space=vmem, size = 0x8000, scoped, tag = 'input window, operand 3, single buffered']
    #allocation6 [shape = 's32[1]{0}', space=sflag, size = 0x4, scoped, tag = 'scoped memory for autoencoder_forward.1']
    #allocation7 [shape = 'u8[32768]{0}', space=vmem, size = 0x8000, scoped, tag = 'input window, operand 5, single buffered']
    #allocation8 [shape = 'u8[32768]{0}', space=vmem, size = 0x8000, scoped, tag = 'input window, operand 7, single buffered']
    #allocation9 [shape = 's32[1]{0}', space=sflag, size = 0x4, scoped, tag = 'scoped memory for autoencoder_forward.1']
    #allocation10 [shape = 'u8[8192]{0}', space=vmem, size = 0x2000, scoped, tag = 'output window, operand 0']
    #allocation11 [shape = 'u8[8192]{0}', space=vmem, size = 0x2000, scoped, tag = 'output window, operand 1']
    #allocation12 [shape = 's32[2]{0}', space=sflag, size = 0x8, scoped, tag = 'scoped memory for autoencoder_forward.1']
    %16 = vsyncpa [#allocation3], 0
    %17 = vsyncpa [#allocation6], 0
    %18 = vsyncpa [#allocation9], 0
    %19 = vsyncpa [#allocation4], 0
    %s20 = scalar_lea.sflag [#allocation4], 1
    %21 = vsyncpa %s20, 0
    %22 = vsyncpa [#allocation12], 0
    %s23 = scalar_lea.sflag [#allocation12], 1
    %24 = vsyncpa %s23, 0
    loop: start=0, step=1, limit=4
    $region2: #{autoencoder_forward.1} parent=1 // loop_pre_header
      _
    $region3: #{autoencoder_forward.1} parent=1 // loop_header
      %s26 = sphi 0, %s30
      %p27 = scmp.ge.s32.totalorder %s26, 4
      %s36 = sphi 0, %s38
      %s39 = sphi 0, %s36
      %s40 = sphi 0, %s39
      %s56 = sphi 0, %s40
      %s60 = sphi 0, %s60
      %s62 = sphi 0, %s60
      %s63 = sphi 0, %s62
      %s77 = sphi 0, %s63
      %s81 = sphi 0, %s81
      %s83 = sphi 0, %s81
      %s84 = sphi 0, %s83
      %s98 = sphi 0, %s84
      %s102 = sphi 0, %s102
      %s104 = sphi 0, %s102
      %s105 = sphi 0, %s104
      %s119 = sphi 0, %s105
      %s123 = sphi 0, %s123
      %s125 = sphi 0, %s123
      %s126 = sphi 0, %s125
      %s140 = sphi 0, %s126
      %s144 = sphi 0, %s144
      %s146 = sphi 0, %s144
      %s147 = sphi 0, %s146
      %s161 = sphi 0, %s147
      %s165 = sphi 0, %s165
      %s167 = sphi 0, %s165
      %s168 = sphi 0, %s167
      %s182 = sphi 0, %s168
      %s186 = sphi 0, %s186
      %s188 = sphi 0, %s186
      %s189 = sphi 0, %s188
      %s203 = sphi 0, %s189
      %s207 = sphi 0, %s207
      %s209 = sphi 0, %s207
      %s210 = sphi 0, %s209
      %s224 = sphi 0, %s210
      %s230 = sphi 0, %s232
      %s233 = sphi 0, %s230
      %s234 = sphi 0, %s233
      %s250 = sphi 0, %s234
      %s256 = sphi 0, %s258
      %s259 = sphi 0, %s256
      %s260 = sphi 0, %s259
      %s276 = sphi 0, %s260
    $region4: #{autoencoder_forward.1} parent=1 // loop_header_branch
      %29 = sbr.rel (%p27) target = $region8
    $region5: #{autoencoder_forward.1} parent=1 // loop_body
      %s31 = ssub.s32 %s26, 1
      %s32 = ssub.s32 %s26, 2
      %s33 = sadd.s32 %s26, 1
      %s34 = ssub.s32 %s26, %s33
      %p35 = scmp.eq.s32.totalorder %s34, 0
      %s37 = sadd.s32 %s36, 1
      %s38 = scalar_select %p35, %s36, %s37
      %p41 = pneg %p35
      %p42 = scmp.eq.s32.totalorder %s26, 1
      %p43 = por %p41, %p42
      %p44 = scmp.ne.s32.totalorder %s36, %s39
      %p45 = scmp.eq.s32.totalorder %s26, 0
      %p46 = por %p44, %p45
      %p47 = scmp.ne.s32.totalorder %s36, %s39
      %p48 = scmp.eq.s32.totalorder %s31, 1
      %p49 = por %p47, %p48
      %p50 = scmp.ne.s32.totalorder %s39, %s40
      %p51 = scmp.eq.s32.totalorder %s31, 0
      %p52 = por %p50, %p51
      %p53 = scmp.ne.s32.totalorder %s39, %s40
      %p54 = scmp.eq.s32.totalorder %s32, 1
      %p55 = por %p53, %p54
      %p57 = scmp.ne.s32.totalorder %s40, %s56
      %p58 = scmp.eq.s32.totalorder %s32, 0
      %p59 = por %p57, %p58
      %s61 = sadd.s32 %s60, 1
      %p64 = scmp.eq.s32.totalorder %s26, 1
      %p65 = scmp.ne.s32.totalorder %s60, %s62
      %p66 = scmp.eq.s32.totalorder %s26, 0
      %p67 = por %p65, %p66
      %p68 = scmp.ne.s32.totalorder %s60, %s62
      %p69 = scmp.eq.s32.totalorder %s31, 1
      %p70 = por %p68, %p69
      %p71 = scmp.ne.s32.totalorder %s62, %s63
      %p72 = scmp.eq.s32.totalorder %s31, 0
      %p73 = por %p71, %p72
      %p74 = scmp.ne.s32.totalorder %s62, %s63
      %p75 = scmp.eq.s32.totalorder %s32, 1
      %p76 = por %p74, %p75
      %p78 = scmp.ne.s32.totalorder %s63, %s77
      %p79 = scmp.eq.s32.totalorder %s32, 0
      %p80 = por %p78, %p79
      %s82 = sadd.s32 %s81, 1
      %p85 = scmp.eq.s32.totalorder %s26, 1
      %p86 = scmp.ne.s32.totalorder %s81, %s83
      %p87 = scmp.eq.s32.totalorder %s26, 0
      %p88 = por %p86, %p87
      %p89 = scmp.ne.s32.totalorder %s81, %s83
      %p90 = scmp.eq.s32.totalorder %s31, 1
      %p91 = por %p89, %p90
      %p92 = scmp.ne.s32.totalorder %s83, %s84
      %p93 = scmp.eq.s32.totalorder %s31, 0
      %p94 = por %p92, %p93
      %p95 = scmp.ne.s32.totalorder %s83, %s84
      %p96 = scmp.eq.s32.totalorder %s32, 1
      %p97 = por %p95, %p96
      %p99 = scmp.ne.s32.totalorder %s84, %s98
      %p100 = scmp.eq.s32.totalorder %s32, 0
      %p101 = por %p99, %p100
      %s103 = sadd.s32 %s102, 1
      %p106 = scmp.eq.s32.totalorder %s26, 1
      %p107 = scmp.ne.s32.totalorder %s102, %s104
      %p108 = scmp.eq.s32.totalorder %s26, 0
      %p109 = por %p107, %p108
      %p110 = scmp.ne.s32.totalorder %s102, %s104
      %p111 = scmp.eq.s32.totalorder %s31, 1
      %p112 = por %p110, %p111
      %p113 = scmp.ne.s32.totalorder %s104, %s105
      %p114 = scmp.eq.s32.totalorder %s31, 0
      %p115 = por %p113, %p114
      %p116 = scmp.ne.s32.totalorder %s104, %s105
      %p117 = scmp.eq.s32.totalorder %s32, 1
      %p118 = por %p116, %p117
      %p120 = scmp.ne.s32.totalorder %s105, %s119
      %p121 = scmp.eq.s32.totalorder %s32, 0
      %p122 = por %p120, %p121
      %s124 = sadd.s32 %s123, 1
      %p127 = scmp.eq.s32.totalorder %s26, 1
      %p128 = scmp.ne.s32.totalorder %s123, %s125
      %p129 = scmp.eq.s32.totalorder %s26, 0
      %p130 = por %p128, %p129
      %p131 = scmp.ne.s32.totalorder %s123, %s125
      %p132 = scmp.eq.s32.totalorder %s31, 1
      %p133 = por %p131, %p132
      %p134 = scmp.ne.s32.totalorder %s125, %s126
      %p135 = scmp.eq.s32.totalorder %s31, 0
      %p136 = por %p134, %p135
      %p137 = scmp.ne.s32.totalorder %s125, %s126
      %p138 = scmp.eq.s32.totalorder %s32, 1
      %p139 = por %p137, %p138
      %p141 = scmp.ne.s32.totalorder %s126, %s140
      %p142 = scmp.eq.s32.totalorder %s32, 0
      %p143 = por %p141, %p142
      %s145 = sadd.s32 %s144, 1
      %p148 = scmp.eq.s32.totalorder %s26, 1
      %p149 = scmp.ne.s32.totalorder %s144, %s146
      %p150 = scmp.eq.s32.totalorder %s26, 0
      %p151 = por %p149, %p150
      %p152 = scmp.ne.s32.totalorder %s144, %s146
      %p153 = scmp.eq.s32.totalorder %s31, 1
      %p154 = por %p152, %p153
      %p155 = scmp.ne.s32.totalorder %s146, %s147
      %p156 = scmp.eq.s32.totalorder %s31, 0
      %p157 = por %p155, %p156
      %p158 = scmp.ne.s32.totalorder %s146, %s147
      %p159 = scmp.eq.s32.totalorder %s32, 1
      %p160 = por %p158, %p159
      %p162 = scmp.ne.s32.totalorder %s147, %s161
      %p163 = scmp.eq.s32.totalorder %s32, 0
      %p164 = por %p162, %p163
      %s166 = sadd.s32 %s165, 1
      %p169 = scmp.eq.s32.totalorder %s26, 1
      %p170 = scmp.ne.s32.totalorder %s165, %s167
      %p171 = scmp.eq.s32.totalorder %s26, 0
      %p172 = por %p170, %p171
      %p173 = scmp.ne.s32.totalorder %s165, %s167
      %p174 = scmp.eq.s32.totalorder %s31, 1
      %p175 = por %p173, %p174
      %p176 = scmp.ne.s32.totalorder %s167, %s168
      %p177 = scmp.eq.s32.totalorder %s31, 0
      %p178 = por %p176, %p177
      %p179 = scmp.ne.s32.totalorder %s167, %s168
      %p180 = scmp.eq.s32.totalorder %s32, 1
      %p181 = por %p179, %p180
      %p183 = scmp.ne.s32.totalorder %s168, %s182
      %p184 = scmp.eq.s32.totalorder %s32, 0
      %p185 = por %p183, %p184
      %s187 = sadd.s32 %s186, 1
      %p190 = scmp.eq.s32.totalorder %s26, 1
      %p191 = scmp.ne.s32.totalorder %s186, %s188
      %p192 = scmp.eq.s32.totalorder %s26, 0
      %p193 = por %p191, %p192
      %p194 = scmp.ne.s32.totalorder %s186, %s188
      %p195 = scmp.eq.s32.totalorder %s31, 1
      %p196 = por %p194, %p195
      %p197 = scmp.ne.s32.totalorder %s188, %s189
      %p198 = scmp.eq.s32.totalorder %s31, 0
      %p199 = por %p197, %p198
      %p200 = scmp.ne.s32.totalorder %s188, %s189
      %p201 = scmp.eq.s32.totalorder %s32, 1
      %p202 = por %p200, %p201
      %p204 = scmp.ne.s32.totalorder %s189, %s203
      %p205 = scmp.eq.s32.totalorder %s32, 0
      %p206 = por %p204, %p205
      %s208 = sadd.s32 %s207, 1
      %p211 = scmp.eq.s32.totalorder %s26, 1
      %p212 = scmp.ne.s32.totalorder %s207, %s209
      %p213 = scmp.eq.s32.totalorder %s26, 0
      %p214 = por %p212, %p213
      %p215 = scmp.ne.s32.totalorder %s207, %s209
      %p216 = scmp.eq.s32.totalorder %s31, 1
      %p217 = por %p215, %p216
      %p218 = scmp.ne.s32.totalorder %s209, %s210
      %p219 = scmp.eq.s32.totalorder %s31, 0
      %p220 = por %p218, %p219
      %p221 = scmp.ne.s32.totalorder %s209, %s210
      %p222 = scmp.eq.s32.totalorder %s32, 1
      %p223 = por %p221, %p222
      %p225 = scmp.ne.s32.totalorder %s210, %s224
      %p226 = scmp.eq.s32.totalorder %s32, 0
      %p227 = por %p225, %p226
      %s228 = ssub.s32 %s26, %s33
      %p229 = scmp.eq.s32.totalorder %s228, 0
      %s231 = sadd.s32 %s230, 1
      %s232 = scalar_select %p229, %s230, %s231
      %p235 = pneg %p229
      %p236 = scmp.eq.s32.totalorder %s26, 1
      %p237 = por %p235, %p236
      %p238 = scmp.ne.s32.totalorder %s230, %s233
      %p239 = scmp.eq.s32.totalorder %s26, 0
      %p240 = por %p238, %p239
      %p241 = scmp.ne.s32.totalorder %s230, %s233
      %p242 = scmp.eq.s32.totalorder %s31, 1
      %p243 = por %p241, %p242
      %p244 = scmp.ne.s32.totalorder %s233, %s234
      %p245 = scmp.eq.s32.totalorder %s31, 0
      %p246 = por %p244, %p245
      %p247 = scmp.ne.s32.totalorder %s233, %s234
      %p248 = scmp.eq.s32.totalorder %s32, 1
      %p249 = por %p247, %p248
      %p251 = scmp.ne.s32.totalorder %s234, %s250
      %p252 = scmp.eq.s32.totalorder %s32, 0
      %p253 = por %p251, %p252
      %s254 = ssub.s32 %s26, %s33
      %p255 = scmp.eq.s32.totalorder %s254, 0
      %s257 = sadd.s32 %s256, 1
      %s258 = scalar_select %p255, %s256, %s257
      %p261 = pneg %p255
      %p262 = scmp.eq.s32.totalorder %s26, 1
      %p263 = por %p261, %p262
      %p264 = scmp.ne.s32.totalorder %s256, %s259
      %p265 = scmp.eq.s32.totalorder %s26, 0
      %p266 = por %p264, %p265
      %p267 = scmp.ne.s32.totalorder %s256, %s259
      %p268 = scmp.eq.s32.totalorder %s31, 1
      %p269 = por %p267, %p268
      %p270 = scmp.ne.s32.totalorder %s259, %s260
      %p271 = scmp.eq.s32.totalorder %s31, 0
      %p272 = por %p270, %p271
      %p273 = scmp.ne.s32.totalorder %s259, %s260
      %p274 = scmp.eq.s32.totalorder %s32, 1
      %p275 = por %p273, %p274
      %p277 = scmp.ne.s32.totalorder %s260, %s276
      %p278 = scmp.eq.s32.totalorder %s32, 0
      %p279 = por %p277, %p278
      %p280 = scmp.le.s32.totalorder 1, %s26
      %p281 = scmp.lt.s32.totalorder %s26, 3
      %p282 = pnand %p280, %p281
      %p283 = pneg %p282
      // Predicated region
      $region9: #{autoencoder_forward.1} parent=5 // pred_check
        _
      $region10: #{autoencoder_forward.1} parent=5 // pred_check_branch
        %285 = sbr.rel (%p282) target = $region12
      $region11: #{autoencoder_forward.1} parent=5 // pred_region
        %s286 = ssub.s32 %s26, 1
        // Predicated region
        $region13: #{autoencoder_forward.1} parent=11 // pred_check
          %p287 = pneg %p73
        $region14: #{autoencoder_forward.1} parent=11 // pred_check_branch
          %289 = sbr.rel (%p287) target = $region16
        $region15: #{autoencoder_forward.1} parent=11 // pred_region
          %291 = vsyncadd [#allocation3], 0
          %s292 = sshll.u32 %s1, 4
          %s293 = int_to_ptr.hbm [resolvable:$true] %s292
          %s294 = sshll.u32 [#allocation2], 4
          %s295 = int_to_ptr.vmem [resolvable:$true] %s294
          %300 = dma.hbm_to_vmem [thread:$0]  %s293, 1024, %s295, [#allocation3], 64, 64, 4
        $region16: #{autoencoder_forward.1} parent=11 // pred_fallthru
          _
        // Predicated region
        $region17: #{autoencoder_forward.1} parent=11 // pred_check
          %p301 = pneg %p94
        $region18: #{autoencoder_forward.1} parent=11 // pred_check_branch
          %303 = sbr.rel (%p301) target = $region20
        $region19: #{autoencoder_forward.1} parent=11 // pred_region
          _
        $region20: #{autoencoder_forward.1} parent=11 // pred_fallthru
          _
        // Predicated region
        $region21: #{autoencoder_forward.1} parent=11 // pred_check
          %p304 = pneg %p115
        $region22: #{autoencoder_forward.1} parent=11 // pred_check_branch
          %306 = sbr.rel (%p304) target = $region24
        $region23: #{autoencoder_forward.1} parent=11 // pred_region
          %308 = vsyncadd [#allocation6], 0
          %s309 = sshll.u32 %s3, 4
          %s310 = int_to_ptr.hbm [resolvable:$true] %s309
          %s311 = sshll.u32 [#allocation5], 4
          %s312 = int_to_ptr.vmem [resolvable:$true] %s311
          %317 = dma.hbm_to_vmem [thread:$0]  %s310, 1024, %s312, [#allocation6], 64, 64, 4
        $region24: #{autoencoder_forward.1} parent=11 // pred_fallthru
          _
        // Predicated region
        $region25: #{autoencoder_forward.1} parent=11 // pred_check
          %p318 = pneg %p136
        $region26: #{autoencoder_forward.1} parent=11 // pred_check_branch
          %320 = sbr.rel (%p318) target = $region28
        $region27: #{autoencoder_forward.1} parent=11 // pred_region
          _
        $region28: #{autoencoder_forward.1} parent=11 // pred_fallthru
          _
        // Predicated region
        $region29: #{autoencoder_forward.1} parent=11 // pred_check
          %p321 = pneg %p157
        $region30: #{autoencoder_forward.1} parent=11 // pred_check_branch
          %323 = sbr.rel (%p321) target = $region32
        $region31: #{autoencoder_forward.1} parent=11 // pred_region
          %325 = vsyncadd [#allocation6], 0
          %s326 = sshll.u32 %s5, 4
          %s327 = int_to_ptr.hbm [resolvable:$true] %s326
          %s328 = sshll.u32 [#allocation7], 4
          %s329 = int_to_ptr.vmem [resolvable:$true] %s328
          %334 = dma.hbm_to_vmem [thread:$0]  %s327, 1024, %s329, [#allocation6], 64, 64, 4
        $region32: #{autoencoder_forward.1} parent=11 // pred_fallthru
          _
        // Predicated region
        $region33: #{autoencoder_forward.1} parent=11 // pred_check
          %p335 = pneg %p178
        $region34: #{autoencoder_forward.1} parent=11 // pred_check_branch
          %337 = sbr.rel (%p335) target = $region36
        $region35: #{autoencoder_forward.1} parent=11 // pred_region
          _
        $region36: #{autoencoder_forward.1} parent=11 // pred_fallthru
          _
        // Predicated region
        $region37: #{autoencoder_forward.1} parent=11 // pred_check
          %p338 = pneg %p199
        $region38: #{autoencoder_forward.1} parent=11 // pred_check_branch
          %340 = sbr.rel (%p338) target = $region40
        $region39: #{autoencoder_forward.1} parent=11 // pred_region
          %342 = vsyncadd [#allocation9], 0
          %s343 = sshll.u32 %s7, 4
          %s344 = int_to_ptr.hbm [resolvable:$true] %s343
          %s345 = sshll.u32 [#allocation8], 4
          %s346 = int_to_ptr.vmem [resolvable:$true] %s345
          %351 = dma.hbm_to_vmem [thread:$0]  %s344, 1024, %s346, [#allocation9], 64, 64, 4
        $region40: #{autoencoder_forward.1} parent=11 // pred_fallthru
          _
        // Predicated region
        $region41: #{autoencoder_forward.1} parent=11 // pred_check
          %p352 = pneg %p220
        $region42: #{autoencoder_forward.1} parent=11 // pred_check_branch
          %354 = sbr.rel (%p352) target = $region44
        $region43: #{autoencoder_forward.1} parent=11 // pred_region
          _
        $region44: #{autoencoder_forward.1} parent=11 // pred_fallthru
          _
      $region12: #{autoencoder_forward.1} parent=5 // pred_fallthru
        _
      %p355 = scmp.lt.s32.totalorder %s26, 2
      // Predicated region
      $region45: #{autoencoder_forward.1} parent=5 // pred_check
        %p356 = pneg %p355
      $region46: #{autoencoder_forward.1} parent=5 // pred_check_branch
        %358 = sbr.rel (%p356) target = $region48
      $region47: #{autoencoder_forward.1} parent=5 // pred_region
        // Predicated region
        $region49: #{autoencoder_forward.1} parent=47 // pred_check
          %p359 = pneg %p46
        $region50: #{autoencoder_forward.1} parent=47 // pred_check_branch
          %361 = sbr.rel (%p359) target = $region52
        $region51: #{autoencoder_forward.1} parent=47 // pred_region
          %p362 = scmp.lt.s32.totalorder %s26, 1
          %s363 = scalar_select %p362, %s26, 1
          %s364 = smul.addr %s363, 4
          %s365 = scalar_lea.vmem %s0, %s364
        $region52: #{autoencoder_forward.1} parent=47 // pred_fallthru
          _
      $region48: #{autoencoder_forward.1} parent=5 // pred_fallthru
        _
      %p366 = scmp.le.s32.totalorder 1, %s26
      %p367 = scmp.lt.s32.totalorder %s26, 3
      %p368 = pnand %p366, %p367
      %p369 = pneg %p368
      // Predicated region
      $region53: #{autoencoder_forward.1} parent=5 // pred_check
        _
      $region54: #{autoencoder_forward.1} parent=5 // pred_check_branch
        %371 = sbr.rel (%p368) target = $region56
      $region55: #{autoencoder_forward.1} parent=5 // pred_region
        %s372 = ssub.s32 %s26, 1
        // Predicated region
        $region57: #{autoencoder_forward.1} parent=55 // pred_check
          %p373 = pneg %p73
        $region58: #{autoencoder_forward.1} parent=55 // pred_check_branch
          %375 = sbr.rel (%p373) target = $region60
        $region59: #{autoencoder_forward.1} parent=55 // pred_region
          %377 = dma.done [#allocation3], 1024
        $region60: #{autoencoder_forward.1} parent=55 // pred_fallthru
          _
        // Predicated region
        $region61: #{autoencoder_forward.1} parent=55 // pred_check
          %p378 = pneg %p115
        $region62: #{autoencoder_forward.1} parent=55 // pred_check_branch
          %380 = sbr.rel (%p378) target = $region64
        $region63: #{autoencoder_forward.1} parent=55 // pred_region
          %382 = dma.done [#allocation6], 1024
        $region64: #{autoencoder_forward.1} parent=55 // pred_fallthru
          _
        // Predicated region
        $region65: #{autoencoder_forward.1} parent=55 // pred_check
          %p383 = pneg %p157
        $region66: #{autoencoder_forward.1} parent=55 // pred_check_branch
          %385 = sbr.rel (%p383) target = $region68
        $region67: #{autoencoder_forward.1} parent=55 // pred_region
          %387 = dma.done [#allocation6], 1024
        $region68: #{autoencoder_forward.1} parent=55 // pred_fallthru
          _
        // Predicated region
        $region69: #{autoencoder_forward.1} parent=55 // pred_check
          %p388 = pneg %p199
        $region70: #{autoencoder_forward.1} parent=55 // pred_check_branch
          %390 = sbr.rel (%p388) target = $region72
        $region71: #{autoencoder_forward.1} parent=55 // pred_region
          %392 = dma.done [#allocation9], 1024
        $region72: #{autoencoder_forward.1} parent=55 // pred_fallthru
          _
        %p393 = scmp.lt.s32.totalorder %s31, 1
        %s394 = scalar_select %p393, %s31, 1
        %s395 = smul.addr %s394, 4
        %s396 = scalar_lea.vmem %s0, %s395
        %p397 = pneg %p52
        %p398 = pneg %p49
        %p399 = pneg %p73
        %p400 = pneg %p70
        %p401 = pneg %p94
        %p402 = pneg %p91
        %p403 = pneg %p115
        %p404 = pneg %p112
        %p405 = pneg %p136
        %p406 = pneg %p133
        %p407 = pneg %p157
        %p408 = pneg %p154
        %p409 = pneg %p178
        %p410 = pneg %p175
        %p411 = pneg %p199
        %p412 = pneg %p196
        %p413 = pneg %p220
        %p414 = pneg %p217
        %p415 = pneg %p246
        %p416 = pneg %p243
        %s417 = sand.u32 %s233, 1
        %s418 = scalar_lea.sflag [#allocation4], %s417
        %s419 = sand.u32 %s233, 1
        %s420 = smul.addr %s419, 8
        %s421 = scalar_lea.vmem [#allocation10], %s420
        %p422 = pneg %p272
        %p423 = pneg %p269
        %s424 = sand.u32 %s259, 1
        %s425 = scalar_lea.sflag [#allocation12], %s424
        %s426 = sand.u32 %s259, 1
        %s427 = smul.addr %s426, 8
        %s428 = scalar_lea.vmem [#allocation11], %s427
        %p429 = scmp.lt.s32.totalorder %s31, 1
        %s430 = scalar_select %p429, %s31, 1
        %s431 = smul.addr %s430, 4
        %s432 = scalar_lea.vmem %s0, %s431
        %v433 = vld [vmem:[%s432] sm:$0xf]
        %v434 = vld [vmem:[#allocation2] sm:$0xf]
        %v435 = vld [vmem:[#allocation2 + $0x4] sm:$0xf]
        %v436 = vld [vmem:[#allocation2 + $0x8] sm:$0xf]
        %v437 = vld [vmem:[#allocation2 + $0xc] sm:$0xf]
        %v438 = vld [vmem:[#allocation2 + $0x10] sm:$0xf]
        %v439 = vld [vmem:[#allocation2 + $0x14] sm:$0xf]
        %v440 = vld [vmem:[#allocation2 + $0x18] sm:$0xf]
        %v441 = vld [vmem:[#allocation2 + $0x1c] sm:$0xf]
        %v442 = vld [vmem:[#allocation2 + $0x20] sm:$0xf]
        %v443 = vld [vmem:[#allocation2 + $0x24] sm:$0xf]
        %v444 = vld [vmem:[#allocation2 + $0x28] sm:$0xf]
        %v445 = vld [vmem:[#allocation2 + $0x2c] sm:$0xf]
        %v446 = vld [vmem:[#allocation2 + $0x30] sm:$0xf]
        %v447 = vld [vmem:[#allocation2 + $0x34] sm:$0xf]
        %v448 = vld [vmem:[#allocation2 + $0x38] sm:$0xf]
        %v449 = vld [vmem:[#allocation2 + $0x3c] sm:$0xf]
        %v450 = vld [vmem:[%s2] sm:$0x1]
        %v452 = vperm.slane %v450, 0
        %v470 = vunpack.c.l.b16 %v434
        %v471 = vunpack.c.l.b16 %v435
        %v472 = vunpack.c.l.b16 %v436
        %v473 = vunpack.c.l.b16 %v437
        %v474 = vunpack.c.l.b16 %v438
        %v475 = vunpack.c.l.b16 %v439
        %v476 = vunpack.c.l.b16 %v440
        %v477 = vunpack.c.l.b16 %v441
        %v478 = vunpack.c.l.b16 %v442
        %v479 = vunpack.c.l.b16 %v443
        %v480 = vunpack.c.l.b16 %v444
        %v481 = vunpack.c.l.b16 %v445
        %v482 = vunpack.c.l.b16 %v446
        %v483 = vunpack.c.l.b16 %v447
        %v484 = vunpack.c.l.b16 %v448
        %v485 = vunpack.c.l.b16 %v449
        %v486 = vpack.c.b16 %v471, %v470
        %v487 = vpack.c.b16 %v473, %v472
        %v488 = vpack.c.b16 %v475, %v474
        %v489 = vpack.c.b16 %v477, %v476
        %v490 = vpack.c.b16 %v479, %v478
        %v491 = vpack.c.b16 %v481, %v480
        %v492 = vpack.c.b16 %v483, %v482
        %v493 = vpack.c.b16 %v485, %v484
        %502 = vmatpush.bf16.msra.mxu0 %v493
        %503 = vmatpush.bf16.msra.mxu0 %v492
        %504 = vmatpush.bf16.msra.mxu0 %v491
        %505 = vmatpush.bf16.msra.mxu0 %v490
        %506 = vmatpush.bf16.msra.mxu0 %v489
        %507 = vmatpush.bf16.msra.mxu0 %v488
        %508 = vmatpush.bf16.msra.mxu0 %v487
        %509 = vmatpush.bf16.msra.mxu0 %v486
        %510 = vmatmul.bf16.gmra.mxu0 %v433
        %v511 = vpop.f32.mrf.mxu0
        %v512 = vadd.f32 %v452, %v511
        %v513 = vpop.f32.mrf.mxu0
        %514 = vdwg.mxu0
        %v515 = vmax.f32 %v512, 0.0
        %v516 = vpack.c.bf16 %v515, %v515
        %v517 = vld [vmem:[#allocation5] sm:$0xf]
        %v518 = vld [vmem:[#allocation5 + $0x4] sm:$0xf]
        %v519 = vld [vmem:[#allocation5 + $0x8] sm:$0xf]
        %v520 = vld [vmem:[#allocation5 + $0xc] sm:$0xf]
        %v521 = vld [vmem:[#allocation5 + $0x10] sm:$0xf]
        %v522 = vld [vmem:[#allocation5 + $0x14] sm:$0xf]
        %v523 = vld [vmem:[#allocation5 + $0x18] sm:$0xf]
        %v524 = vld [vmem:[#allocation5 + $0x1c] sm:$0xf]
        %v525 = vld [vmem:[#allocation5 + $0x20] sm:$0xf]
        %v526 = vld [vmem:[#allocation5 + $0x24] sm:$0xf]
        %v527 = vld [vmem:[#allocation5 + $0x28] sm:$0xf]
        %v528 = vld [vmem:[#allocation5 + $0x2c] sm:$0xf]
        %v529 = vld [vmem:[#allocation5 + $0x30] sm:$0xf]
        %v530 = vld [vmem:[#allocation5 + $0x34] sm:$0xf]
        %v531 = vld [vmem:[#allocation5 + $0x38] sm:$0xf]
        %v532 = vld [vmem:[#allocation5 + $0x3c] sm:$0xf]
        %v533 = vld [vmem:[%s4] sm:$0x1]
        %v535 = vperm.slane %v533, 0
        %v553 = vunpack.c.l.b16 %v517
        %v554 = vunpack.c.l.b16 %v518
        %v555 = vunpack.c.l.b16 %v519
        %v556 = vunpack.c.l.b16 %v520
        %v557 = vunpack.c.l.b16 %v521
        %v558 = vunpack.c.l.b16 %v522
        %v559 = vunpack.c.l.b16 %v523
        %v560 = vunpack.c.l.b16 %v524
        %v561 = vunpack.c.l.b16 %v525
        %v562 = vunpack.c.l.b16 %v526
        %v563 = vunpack.c.l.b16 %v527
        %v564 = vunpack.c.l.b16 %v528
        %v565 = vunpack.c.l.b16 %v529
        %v566 = vunpack.c.l.b16 %v530
        %v567 = vunpack.c.l.b16 %v531
        %v568 = vunpack.c.l.b16 %v532
        %v569 = vpack.c.b16 %v554, %v553
        %v570 = vpack.c.b16 %v556, %v555
        %v571 = vpack.c.b16 %v558, %v557
        %v572 = vpack.c.b16 %v560, %v559
        %v573 = vpack.c.b16 %v562, %v561
        %v574 = vpack.c.b16 %v564, %v563
        %v575 = vpack.c.b16 %v566, %v565
        %v576 = vpack.c.b16 %v568, %v567
        %585 = vmatpush.bf16.msra.mxu0 %v576
        %586 = vmatpush.bf16.msra.mxu0 %v575
        %587 = vmatpush.bf16.msra.mxu0 %v574
        %588 = vmatpush.bf16.msra.mxu0 %v573
        %589 = vmatpush.bf16.msra.mxu0 %v572
        %590 = vmatpush.bf16.msra.mxu0 %v571
        %591 = vmatpush.bf16.msra.mxu0 %v570
        %592 = vmatpush.bf16.msra.mxu0 %v569
        %593 = vmatmul.bf16.gmra.mxu0 %v516
        %v594 = vpop.f32.mrf.mxu0
        %v595 = vadd.f32 %v535, %v594
        %v596 = vpop.f32.mrf.mxu0
        %597 = vdwg.mxu0
        %v598 = vpack.c.bf16 %v595, %v595
        %v599 = vld [vmem:[#allocation7] sm:$0xf]
        %v600 = vld [vmem:[#allocation7 + $0x4] sm:$0xf]
        %v601 = vld [vmem:[#allocation7 + $0x8] sm:$0xf]
        %v602 = vld [vmem:[#allocation7 + $0xc] sm:$0xf]
        %v603 = vld [vmem:[#allocation7 + $0x10] sm:$0xf]
        %v604 = vld [vmem:[#allocation7 + $0x14] sm:$0xf]
        %v605 = vld [vmem:[#allocation7 + $0x18] sm:$0xf]
        %v606 = vld [vmem:[#allocation7 + $0x1c] sm:$0xf]
        %v607 = vld [vmem:[#allocation7 + $0x20] sm:$0xf]
        %v608 = vld [vmem:[#allocation7 + $0x24] sm:$0xf]
        %v609 = vld [vmem:[#allocation7 + $0x28] sm:$0xf]
        %v610 = vld [vmem:[#allocation7 + $0x2c] sm:$0xf]
        %v611 = vld [vmem:[#allocation7 + $0x30] sm:$0xf]
        %v612 = vld [vmem:[#allocation7 + $0x34] sm:$0xf]
        %v613 = vld [vmem:[#allocation7 + $0x38] sm:$0xf]
        %v614 = vld [vmem:[#allocation7 + $0x3c] sm:$0xf]
        %v615 = vld [vmem:[%s6] sm:$0x1]
        %v617 = vperm.slane %v615, 0
        %v635 = vunpack.c.l.b16 %v599
        %v636 = vunpack.c.l.b16 %v600
        %v637 = vunpack.c.l.b16 %v601
        %v638 = vunpack.c.l.b16 %v602
        %v639 = vunpack.c.l.b16 %v603
        %v640 = vunpack.c.l.b16 %v604
        %v641 = vunpack.c.l.b16 %v605
        %v642 = vunpack.c.l.b16 %v606
        %v643 = vunpack.c.l.b16 %v607
        %v644 = vunpack.c.l.b16 %v608
        %v645 = vunpack.c.l.b16 %v609
        %v646 = vunpack.c.l.b16 %v610
        %v647 = vunpack.c.l.b16 %v611
        %v648 = vunpack.c.l.b16 %v612
        %v649 = vunpack.c.l.b16 %v613
        %v650 = vunpack.c.l.b16 %v614
        %v651 = vpack.c.b16 %v636, %v635
        %v652 = vpack.c.b16 %v638, %v637
        %v653 = vpack.c.b16 %v640, %v639
        %v654 = vpack.c.b16 %v642, %v641
        %v655 = vpack.c.b16 %v644, %v643
        %v656 = vpack.c.b16 %v646, %v645
        %v657 = vpack.c.b16 %v648, %v647
        %v658 = vpack.c.b16 %v650, %v649
        %667 = vmatpush.bf16.msra.mxu0 %v658
        %668 = vmatpush.bf16.msra.mxu0 %v657
        %669 = vmatpush.bf16.msra.mxu0 %v656
        %670 = vmatpush.bf16.msra.mxu0 %v655
        %671 = vmatpush.bf16.msra.mxu0 %v654
        %672 = vmatpush.bf16.msra.mxu0 %v653
        %673 = vmatpush.bf16.msra.mxu0 %v652
        %674 = vmatpush.bf16.msra.mxu0 %v651
        %675 = vmatmul.bf16.gmra.mxu0 %v598
        %v676 = vpop.f32.mrf.mxu0
        %v677 = vadd.f32 %v617, %v676
        %v678 = vpop.f32.mrf.mxu0
        %679 = vdwg.mxu0
        %v680 = vmax.f32 %v677, 0.0
        %v681 = vpack.c.bf16 %v680, %v680
        %v682 = vld [vmem:[#allocation8] sm:$0xf]
        %v683 = vld [vmem:[#allocation8 + $0x4] sm:$0xf]
        %v684 = vld [vmem:[#allocation8 + $0x8] sm:$0xf]
        %v685 = vld [vmem:[#allocation8 + $0xc] sm:$0xf]
        %v686 = vld [vmem:[#allocation8 + $0x10] sm:$0xf]
        %v687 = vld [vmem:[#allocation8 + $0x14] sm:$0xf]
        %v688 = vld [vmem:[#allocation8 + $0x18] sm:$0xf]
        %v689 = vld [vmem:[#allocation8 + $0x1c] sm:$0xf]
        %v690 = vld [vmem:[#allocation8 + $0x20] sm:$0xf]
        %v691 = vld [vmem:[#allocation8 + $0x24] sm:$0xf]
        %v692 = vld [vmem:[#allocation8 + $0x28] sm:$0xf]
        %v693 = vld [vmem:[#allocation8 + $0x2c] sm:$0xf]
        %v694 = vld [vmem:[#allocation8 + $0x30] sm:$0xf]
        %v695 = vld [vmem:[#allocation8 + $0x34] sm:$0xf]
        %v696 = vld [vmem:[#allocation8 + $0x38] sm:$0xf]
        %v697 = vld [vmem:[#allocation8 + $0x3c] sm:$0xf]
        %v698 = vld [vmem:[%s8] sm:$0x1]
        %v700 = vperm.slane %v698, 0
        %v718 = vunpack.c.l.b16 %v682
        %v719 = vunpack.c.l.b16 %v683
        %v720 = vunpack.c.l.b16 %v684
        %v721 = vunpack.c.l.b16 %v685
        %v722 = vunpack.c.l.b16 %v686
        %v723 = vunpack.c.l.b16 %v687
        %v724 = vunpack.c.l.b16 %v688
        %v725 = vunpack.c.l.b16 %v689
        %v726 = vunpack.c.l.b16 %v690
        %v727 = vunpack.c.l.b16 %v691
        %v728 = vunpack.c.l.b16 %v692
        %v729 = vunpack.c.l.b16 %v693
        %v730 = vunpack.c.l.b16 %v694
        %v731 = vunpack.c.l.b16 %v695
        %v732 = vunpack.c.l.b16 %v696
        %v733 = vunpack.c.l.b16 %v697
        %v734 = vpack.c.b16 %v719, %v718
        %v735 = vpack.c.b16 %v721, %v720
        %v736 = vpack.c.b16 %v723, %v722
        %v737 = vpack.c.b16 %v725, %v724
        %v738 = vpack.c.b16 %v727, %v726
        %v739 = vpack.c.b16 %v729, %v728
        %v740 = vpack.c.b16 %v731, %v730
        %v741 = vpack.c.b16 %v733, %v732
        %750 = vmatpush.bf16.msra.mxu0 %v741
        %751 = vmatpush.bf16.msra.mxu0 %v740
        %752 = vmatpush.bf16.msra.mxu0 %v739
        %753 = vmatpush.bf16.msra.mxu0 %v738
        %754 = vmatpush.bf16.msra.mxu0 %v737
        %755 = vmatpush.bf16.msra.mxu0 %v736
        %756 = vmatpush.bf16.msra.mxu0 %v735
        %757 = vmatpush.bf16.msra.mxu0 %v734
        %758 = vmatmul.bf16.gmra.mxu0 %v681
        %v759 = vpop.f32.mrf.mxu0
        %v760 = vadd.f32 %v700, %v759
        %v761 = vpop.f32.mrf.mxu0
        %762 = vdwg.mxu0
        %763 = vst [vmem:[%s421] sm:$0xff] %v595
        %764 = vst [vmem:[%s428] sm:$0xff] %v760
        %s765 = sand.u32 %s233, 1
        %s766 = scalar_lea.sflag [#allocation4], %s765
        %s767 = sand.u32 %s233, 1
        %s768 = smul.addr %s767, 8
        %s769 = scalar_lea.vmem [#allocation10], %s768
        %s770 = sand.u32 %s259, 1
        %s771 = scalar_lea.sflag [#allocation12], %s770
        %s772 = sand.u32 %s259, 1
        %s773 = smul.addr %s772, 8
        %s774 = scalar_lea.vmem [#allocation11], %s773
        // Predicated region
        $region73: #{autoencoder_forward.1} parent=55 // pred_check
          %p775 = pneg %p243
        $region74: #{autoencoder_forward.1} parent=55 // pred_check_branch
          %777 = sbr.rel (%p775) target = $region76
        $region75: #{autoencoder_forward.1} parent=55 // pred_region
          %779 = vsyncadd %s766, 0
          %s780 = smul.addr %s31, 8
          %s781 = scalar_lea.hbm %s9, %s780
          %s783 = sshll.u32 %s769, 4
          %s784 = int_to_ptr.vmem [resolvable:$true] %s783
          %s785 = sshll.u32 %s781, 4
          %s786 = int_to_ptr.hbm [resolvable:$true] %s785
          %788 = dma.vmem_to_hbm [thread:$0]  %s784, 128, %s786, %s766
        $region76: #{autoencoder_forward.1} parent=55 // pred_fallthru
          _
        // Predicated region
        $region77: #{autoencoder_forward.1} parent=55 // pred_check
          %p789 = pneg %p269
        $region78: #{autoencoder_forward.1} parent=55 // pred_check_branch
          %791 = sbr.rel (%p789) target = $region80
        $region79: #{autoencoder_forward.1} parent=55 // pred_region
          %793 = vsyncadd %s771, 0
          %s794 = smul.addr %s31, 8
          %s795 = scalar_lea.hbm %s10, %s794
          %s797 = sshll.u32 %s774, 4
          %s798 = int_to_ptr.vmem [resolvable:$true] %s797
          %s799 = sshll.u32 %s795, 4
          %s800 = int_to_ptr.hbm [resolvable:$true] %s799
          %802 = dma.vmem_to_hbm [thread:$0]  %s798, 128, %s800, %s771
        $region80: #{autoencoder_forward.1} parent=55 // pred_fallthru
          _
      $region56: #{autoencoder_forward.1} parent=5 // pred_fallthru
        _
      %p803 = scmp.le.s32.totalorder 2, %s26
      // Predicated region
      $region81: #{autoencoder_forward.1} parent=5 // pred_check
        %p804 = pneg %p803
      $region82: #{autoencoder_forward.1} parent=5 // pred_check_branch
        %806 = sbr.rel (%p804) target = $region84
      $region83: #{autoencoder_forward.1} parent=5 // pred_region
        %s807 = ssub.s32 %s26, 2
        // Predicated region
        $region85: #{autoencoder_forward.1} parent=83 // pred_check
          %p808 = pneg %p249
        $region86: #{autoencoder_forward.1} parent=83 // pred_check_branch
          %810 = sbr.rel (%p808) target = $region88
        $region87: #{autoencoder_forward.1} parent=83 // pred_region
          %s811 = sand.u32 %s234, 1
          %s812 = scalar_lea.sflag [#allocation4], %s811
          %s813 = sand.u32 %s234, 1
          %s814 = smul.addr %s813, 8
          %s815 = scalar_lea.vmem [#allocation10], %s814
          %817 = dma.done %s812, 128
        $region88: #{autoencoder_forward.1} parent=83 // pred_fallthru
          _
        // Predicated region
        $region89: #{autoencoder_forward.1} parent=83 // pred_check
          %p818 = pneg %p275
        $region90: #{autoencoder_forward.1} parent=83 // pred_check_branch
          %820 = sbr.rel (%p818) target = $region92
        $region91: #{autoencoder_forward.1} parent=83 // pred_region
          %s821 = sand.u32 %s260, 1
          %s822 = scalar_lea.sflag [#allocation12], %s821
          %s823 = sand.u32 %s260, 1
          %s824 = smul.addr %s823, 8
          %s825 = scalar_lea.vmem [#allocation11], %s824
          %827 = dma.done %s822, 128
        $region92: #{autoencoder_forward.1} parent=83 // pred_fallthru
          _
      $region84: #{autoencoder_forward.1} parent=5 // pred_fallthru
        _
    $region6: #{autoencoder_forward.1} parent=1 // loop_footer
      %s30 = sadd.s32 1, %s26
    $region7: #{autoencoder_forward.1} parent=1 // loop_footer_branch
      %25 = sbr.rel target = $region3
    $region8: #{autoencoder_forward.1} parent=1 // loop_exit
      _
    %828 = vsyncpa [#allocation3], 1
    %s829 = scalar_lea.sflag [#allocation3], 1
    %830 = vsyncpa %s829, 1
    %831 = vsyncpa [#allocation6], 1
    %832 = vsyncpa [#allocation9], 1
    %833 = vsyncpa [#allocation4], 1
    %s834 = scalar_lea.sflag [#allocation4], 1
    %835 = vsyncpa %s834, 1
    %836 = vsyncpa [#allocation12], 1
    %s837 = scalar_lea.sflag [#allocation12], 1
    %838 = vsyncpa %s837, 1

</llo_original>
